<compile_context>
chip_gen: v7x
topology: tpu7x:2x2x1
jax: 0.10.0
libtpu: 0.0.40
codegen_flags: <defaults>
</compile_context>

<pallas_src>
import math

import jax
import jax.numpy as jnp
from jax.experimental import pallas as pl
from jax.experimental.pallas import tpu as pltpu


def _bmm(a, b):
    """Batched (B,M,K)@(B,K,N) on the MXU: bf16 operands, f32 accumulation."""
    return jnp.einsum('bmk,bkn->bmn',
                      a.astype(jnp.bfloat16), b.astype(jnp.bfloat16),
                      preferred_element_type=jnp.float32)


def _wmm(a3, w):
    """(B,N,K)@(K,M) weight matmul as one 2-D MXU dot over merged leading dims."""
    bb, n, k = a3.shape
    r = jnp.dot(a3.reshape(bb * n, k).astype(jnp.bfloat16),
                w.astype(jnp.bfloat16),
                preferred_element_type=jnp.float32)
    return r.reshape(bb, n, -1)


# ---------------------------------------------------------------------------
# Fused forward kernel: one grid step == Bblk batch elements.
# ---------------------------------------------------------------------------
def _gcn_fused_kernel(x_ref, adj_ref, onehot_ref, scale_ref,
                      w1_ref, b1_ref, w2_ref, b2_ref, w3r_ref, b3r_ref,
                      w4_ref, b4_ref, w5_ref, b5_ref, o_ref):
    NEG = -1e30  # plain Python float -> jaxpr literal

    adj = adj_ref[...]                       # (Bblk, N, N)   bf16
    x = x_ref[...]                           # (Bblk, N, Fin) bf16

    # ---- GraphConvolution 1: relu(adj @ (x @ W1) + b1); Fin < F1 -> (adj@x)@W1
    h = _wmm(_bmm(adj, x), w1_ref[...]) + b1_ref[...]
    h = jnp.maximum(h, 0.0)
    # TODO(synk): F.dropout omitted (inference mode, training=False -> identity)

    # ---- GraphConvolution 2: relu(adj @ (h @ W2) + b2); F1 < F2 -> (adj@h)@W2
    h = _wmm(_bmm(adj, h), w2_ref[...]) + b2_ref[...]
    h = jnp.maximum(h, 0.0)

    # ---- GraphConvolution 3 with lane-replicated W3/b3 (tiled C times in the
    # wrapper), so the output is already in the flattened (c*F3 + f) layout
    # used by the pooled row / classifier matmul -> no in-kernel tile/reshape.
    h = _bmm(adj, _wmm(h, w3r_ref[...])) + b3r_ref[...]       # (Bblk, N, C*F3) f32

    # ---- scatter(reduce='max') over nodes into clusters, lane-packed:
    # a single full-lane-width masked max over the node (sublane) axis.
    masked = jnp.where(onehot_ref[...] > 0.5, h, NEG)
    pooled = jnp.max(masked, axis=1, keepdims=True)           # (Bblk, 1, C*F3)
    pooled = jnp.where(pooled <= NEG * 0.5, 0.0, pooled)      # empty cluster -> 0
    pooled = pooled * scale_ref[...]                          # * in_node_num * mask
    pooled2 = jnp.squeeze(pooled, axis=1)                     # (Bblk, C*F3)

    # ---- classifier: Linear(16*C, 512) (BN folded) -> ReLU -> Linear(512, NP)
    acc = jnp.dot(pooled2.astype(jnp.bfloat16), w4_ref[...],
                  preferred_element_type=jnp.float32) + b4_ref[...]
    acc = jnp.maximum(acc, 0.0)                               # (Bblk, 512)
    out = jnp.dot(acc.astype(jnp.bfloat16), w5_ref[...],
                  preferred_element_type=jnp.float32) + b5_ref[...]   # (Bblk, NP)
    o_ref[...] = out[:, None, :].astype(o_ref.dtype)


# ---------------------------------------------------------------------------
# Wrapper: fold BN, lane-replicate W3, pad final Linear, single pallas_call.
# ---------------------------------------------------------------------------
def _pick_bblk(batch):
    """Largest divisor of `batch` <= 8 that still leaves >= 2 grid steps."""
    divisors = [d for d in range(1, min(8, batch) + 1) if batch % d == 0]
    bblk = max(divisors)
    if batch >= 2 and batch // bblk < 2:
        two_step = [d for d in divisors if batch // d >= 2]
        if two_step:
            bblk = max(two_step)
    return bblk


def gcn_forward(params, x, adj, mask, in_node_num, groups, cluster_num):
    B, N, Fin = x.shape
    C = cluster_num
    F1 = params["w1"].shape[1]
    F2 = params["w2"].shape[1]
    F3 = params["w3"].shape[1]          # 16
    H = params["w4"].shape[1]           # 512
    nclass = params["w5"].shape[1]
    CF = C * F3                         # flattened pooled width (cluster-major)
    NP = pl.cdiv(nclass, 128) * 128     # lane-dense padded output width

    # Lane-replicate W3 / b3: column (c*F3 + f) of W3r equals column f of W3.
    w3r = jnp.tile(params["w3"], (1, C)).astype(jnp.bfloat16)            # (F2, CF)
    b3r = jnp.tile(params["b3"].reshape(1, F3), (1, C))                  # (1, CF)

    # Fold BatchNorm1d (inference, running stats) into the first classifier Linear.
    w4f = (params["w4"] * params["bn_scale"][None, :]).astype(jnp.bfloat16)
    b4f = (params["b4"] * params["bn_scale"] + params["bn_shift"]).reshape(1, H)

    # Zero-pad the final Linear so the output block is lane-dense (width NP).
    w5p = jnp.zeros((H, NP), jnp.bfloat16).at[:, :nclass].set(
        params["w5"].astype(jnp.bfloat16))
    b5p = jnp.zeros((1, NP), jnp.float32).at[:, :nclass].set(
        params["b5"].reshape(1, nclass))

    # Lane-packed scatter-max mask: onehot[b, n, c*F3 + f] = (groups[b, n] == c).
    onehot = (groups[..., None].astype(jnp.int32) ==
              jnp.arange(C, dtype=jnp.int32)[None, None, :])             # (B, N, C)
    onehot = jnp.repeat(onehot, F3, axis=-1).astype(jnp.float32)         # (B, N, CF)

    # Per-cluster scale row (in_node_num * mask) in the same lane layout.
    scale = in_node_num.astype(jnp.float32) * mask.astype(jnp.float32)   # (B, C)
    scale = jnp.repeat(scale, F3, axis=-1).reshape(B, 1, CF)             # (B, 1, CF)

    x_bf = x.astype(jnp.bfloat16)
    adj_bf = adj.astype(jnp.bfloat16)

    Bblk = _pick_bblk(B)
    G = B // Bblk

    flops = 2 * B * (N * N * Fin + N * Fin * F1 +
                     N * N * F1 + N * F1 * F2 +
                     N * F2 * CF + N * N * CF +
                     CF * H + H * NP)
    bytes_accessed = int(
        2 * (x_bf.size + adj_bf.size + w3r.size + w4f.size + w5p.size +
             params["w1"].size + params["w2"].size) +
        4 * (onehot.size + scale.size + b3r.size + b4f.size + b5p.size +
             F1 + F2 + B * NP))

    out = pl.pallas_call(
        _gcn_fused_kernel,
        out_shape=jax.ShapeDtypeStruct((B, 1, NP), jnp.float32),
        grid=(G,),
        in_specs=[
            pl.BlockSpec((Bblk, N, Fin), lambda i: (i, 0, 0)),   # x (bf16)
            pl.BlockSpec((Bblk, N, N), lambda i: (i, 0, 0)),     # adj (bf16)
            pl.BlockSpec((Bblk, N, CF), lambda i: (i, 0, 0)),    # scatter one-hot
            pl.BlockSpec((Bblk, 1, CF), lambda i: (i, 0, 0)),    # in_node_num*mask
            pl.BlockSpec((Fin, F1), lambda i: (0, 0)),           # w1
            pl.BlockSpec((1, F1), lambda i: (0, 0)),             # b1
            pl.BlockSpec((F1, F2), lambda i: (0, 0)),            # w2
            pl.BlockSpec((1, F2), lambda i: (0, 0)),             # b2
            pl.BlockSpec((F2, CF), lambda i: (0, 0)),            # w3 (replicated)
            pl.BlockSpec((1, CF), lambda i: (0, 0)),             # b3 (replicated)
            pl.BlockSpec((CF, H), lambda i: (0, 0)),             # w4 (BN folded)
            pl.BlockSpec((1, H), lambda i: (0, 0)),              # b4 (BN folded)
            pl.BlockSpec((H, NP), lambda i: (0, 0)),             # w5 (padded)
            pl.BlockSpec((1, NP), lambda i: (0, 0)),             # b5 (padded)
        ],
        out_specs=pl.BlockSpec((Bblk, 1, NP), lambda i: (i, 0, 0)),
        compiler_params=pltpu.CompilerParams(
            dimension_semantics=("parallel",)),
        cost_estimate=pl.CostEstimate(flops=flops, transcendentals=0,
                                      bytes_accessed=bytes_accessed),
    )(
        x_bf, adj_bf, onehot, scale,
        params["w1"].astype(jnp.bfloat16), params["b1"].reshape(1, F1),
        params["w2"].astype(jnp.bfloat16), params["b2"].reshape(1, F2),
        w3r, b3r, w4f, b4f, w5p, b5p,
    )
    return out.reshape(B, NP)[:, :nclass]


# ---------------------------------------------------------------------------
# Deterministic parameter init (mirrors the PyTorch module's shapes)
# ---------------------------------------------------------------------------
def init_params(key, nfeat, nclass, cluster_num):
    ks = jax.random.split(key, 8)

    def gc_init(kw, kb, fin, fout):
        stdv = 1.0 / math.sqrt(fout)
        w = jax.random.uniform(kw, (fin, fout), jnp.float32, -stdv, stdv)
        b = jax.random.uniform(kb, (fout,), jnp.float32, -stdv, stdv)
        return w, b

    w1, b1 = gc_init(ks[0], ks[1], nfeat, nfeat * 2)
    w2, b2 = gc_init(ks[2], ks[3], nfeat * 2, nfeat * 4)
    w3, b3 = gc_init(ks[4], ks[5], nfeat * 4, 16)

    w4 = jax.random.normal(ks[6], (16 * cluster_num, 512), jnp.float32) * 0.05
    b4 = jnp.zeros((512,), jnp.float32)

    eps = 1e-5
    gamma = jnp.ones((512,), jnp.float32)
    beta = jnp.zeros((512,), jnp.float32)
    rmean = jnp.zeros((512,), jnp.float32)
    rvar = jnp.ones((512,), jnp.float32)
    bn_scale = gamma / jnp.sqrt(rvar + eps)
    bn_shift = beta - rmean * bn_scale

    w5 = jax.random.normal(ks[7], (512, nclass), jnp.float32) * 0.05
    b5 = jnp.zeros((nclass,), jnp.float32)

    return dict(w1=w1, b1=b1, w2=w2, b2=b2, w3=w3, b3=b3,
                w4=w4, b4=b4, bn_scale=bn_scale, bn_shift=bn_shift,
                w5=w5, b5=b5)


if __name__ == "__main__":
    B, N, NFEAT, NCLASS, CLUSTERS = 2, 64, 8, 10, 8

    key = jax.random.PRNGKey(0)
    kp, kx, ka, kg, km, kn = jax.random.split(key, 6)

    params = init_params(kp, NFEAT, NCLASS, CLUSTERS)

    x = jax.random.normal(kx, (B, N, NFEAT), jnp.float32)
    adj_raw = jax.random.uniform(ka, (B, N, N), jnp.float32)
    adj = adj_raw / jnp.sum(adj_raw, axis=-1, keepdims=True)         # row-normalized
    groups = jax.random.randint(kg, (B, N), 0, CLUSTERS, jnp.int32)  # node -> cluster
    mask = (jax.random.uniform(km, (B, CLUSTERS)) > 0.3).astype(jnp.float32)
    in_node_num = jax.random.randint(kn, (B, CLUSTERS), 1, 10).astype(jnp.float32)

    out = gcn_forward(params, x, adj, mask, in_node_num, groups, CLUSTERS)
    out = jax.block_until_ready(out)
    assert out.shape == (B, NCLASS), out.shape
    assert bool(jnp.all(jnp.isfinite(out)))
    print("KERNEL_OK")
</pallas_src>

<mosaic_0001>
module attributes {stable_mosaic.version = 11 : i64} {
  func.func @_gcn_fused_kernel(%arg0: i32, %arg1: memref<1x64x8xbf16, #tpu.memory_space<vmem>>, %arg2: memref<1x64x64xbf16, #tpu.memory_space<vmem>>, %arg3: memref<1x64x128xf32, #tpu.memory_space<vmem>>, %arg4: memref<1x1x128xf32, #tpu.memory_space<vmem>>, %arg5: memref<8x16xbf16, #tpu.memory_space<vmem>>, %arg6: memref<1x16xf32, #tpu.memory_space<vmem>>, %arg7: memref<16x32xbf16, #tpu.memory_space<vmem>>, %arg8: memref<1x32xf32, #tpu.memory_space<vmem>>, %arg9: memref<32x128xbf16, #tpu.memory_space<vmem>>, %arg10: memref<1x128xf32, #tpu.memory_space<vmem>>, %arg11: memref<128x512xbf16, #tpu.memory_space<vmem>>, %arg12: memref<1x512xf32, #tpu.memory_space<vmem>>, %arg13: memref<512x128xbf16, #tpu.memory_space<vmem>>, %arg14: memref<1x128xf32, #tpu.memory_space<vmem>>, %arg15: memref<1x1x128xf32, #tpu.memory_space<vmem>>) attributes {dimension_semantics = [#tpu.dimension_semantics<parallel>], iteration_bounds = array<i64: 2>, scalar_prefetch = 0 : i64, scratch_operands = 0 : i64, tpu.core_type = #tpu.core_type<tc>, window_params = [{transform_indices = @transform_0, window_bounds = array<i64: 1, 64, 8>}, {transform_indices = @transform_1, window_bounds = array<i64: 1, 64, 64>}, {transform_indices = @transform_2, window_bounds = array<i64: 1, 64, 128>}, {transform_indices = @transform_3, window_bounds = array<i64: 1, 1, 128>}, {pipeline_mode = #tpu.pipeline_mode<synchronous>, transform_indices = @transform_4, window_bounds = array<i64: 8, 16>}, {pipeline_mode = #tpu.pipeline_mode<synchronous>, transform_indices = @transform_5, window_bounds = array<i64: 1, 16>}, {pipeline_mode = #tpu.pipeline_mode<synchronous>, transform_indices = @transform_6, window_bounds = array<i64: 16, 32>}, {pipeline_mode = #tpu.pipeline_mode<synchronous>, transform_indices = @transform_7, window_bounds = array<i64: 1, 32>}, {pipeline_mode = #tpu.pipeline_mode<synchronous>, transform_indices = @transform_8, window_bounds = array<i64: 32, 128>}, {pipeline_mode = #tpu.pipeline_mode<synchronous>, transform_indices = @transform_9, window_bounds = array<i64: 1, 128>}, {pipeline_mode = #tpu.pipeline_mode<synchronous>, transform_indices = @transform_10, window_bounds = array<i64: 128, 512>}, {pipeline_mode = #tpu.pipeline_mode<synchronous>, transform_indices = @transform_11, window_bounds = array<i64: 1, 512>}, {pipeline_mode = #tpu.pipeline_mode<synchronous>, transform_indices = @transform_12, window_bounds = array<i64: 512, 128>}, {pipeline_mode = #tpu.pipeline_mode<synchronous>, transform_indices = @transform_13, window_bounds = array<i64: 1, 128>}, {transform_indices = @transform_14, window_bounds = array<i64: 1, 1, 128>}]} {
    %c0 = arith.constant 0 : index
    %c0_0 = arith.constant 0 : index
    %c0_1 = arith.constant 0 : index
    %0 = vector.load %arg2[%c0, %c0_0, %c0_1] : memref<1x64x64xbf16, #tpu.memory_space<vmem>>, vector<1x64x64xbf16>
    %c0_2 = arith.constant 0 : index
    %c0_3 = arith.constant 0 : index
    %c0_4 = arith.constant 0 : index
    %1 = vector.load %arg1[%c0_2, %c0_3, %c0_4] : memref<1x64x8xbf16, #tpu.memory_space<vmem>>, vector<1x64x8xbf16>
    "tpu.trace_start"() <{level = 10 : i32, message = "bmk,bkn->bmn"}> : () -> ()
    %cst = arith.constant dense<0.000000e+00> : vector<1x64x8xf32>
    %2 = tpu.matmul %0, %1, %cst {dimension_numbers = #tpu.dot_dimension_numbers<[2], [1], [1], [2], [0, 0, 0, 1, 1, 2], [0], [0]>} : vector<1x64x64xbf16>, vector<1x64x8xbf16>, vector<1x64x8xf32> -> vector<1x64x8xf32>
    "tpu.trace_stop"() : () -> ()
    %c0_5 = arith.constant 0 : index
    %c0_6 = arith.constant 0 : index
    %3 = vector.load %arg5[%c0_5, %c0_6] : memref<8x16xbf16, #tpu.memory_space<vmem>>, vector<8x16xbf16>
    %4 = vector.shape_cast %2 : vector<1x64x8xf32> to vector<64x8xf32>
    %5 = arith.truncf %4 : vector<64x8xf32> to vector<64x8xbf16>
    %cst_7 = arith.constant dense<0.000000e+00> : vector<64x16xf32>
    %6 = tpu.matmul %5, %3, %cst_7 {dimension_numbers = #tpu.dot_dimension_numbers<[1], [0], [0], [1], [0, 0, 1, 1], [], []>} : vector<64x8xbf16>, vector<8x16xbf16>, vector<64x16xf32> -> vector<64x16xf32>
    %7 = vector.shape_cast %6 : vector<64x16xf32> to vector<1x64x16xf32>
    %c0_8 = arith.constant 0 : index
    %c0_9 = arith.constant 0 : index
    %8 = vector.load %arg6[%c0_8, %c0_9] : memref<1x16xf32, #tpu.memory_space<vmem>>, vector<1x16xf32>
    %9 = vector.shape_cast %8 : vector<1x16xf32> to vector<1x1x16xf32>
    %10 = vector.broadcast %9 : vector<1x1x16xf32> to vector<1x64x16xf32>
    %11 = arith.addf %7, %10 : vector<1x64x16xf32>
    %cst_10 = arith.constant 0.000000e+00 : f32
    %12 = vector.broadcast %cst_10 : f32 to vector<1x64x16xf32>
    %13 = arith.maximumf %11, %12 : vector<1x64x16xf32>
    %14 = arith.truncf %13 : vector<1x64x16xf32> to vector<1x64x16xbf16>
    "tpu.trace_start"() <{level = 10 : i32, message = "bmk,bkn->bmn"}> : () -> ()
    %cst_11 = arith.constant dense<0.000000e+00> : vector<1x64x16xf32>
    %15 = tpu.matmul %0, %14, %cst_11 {dimension_numbers = #tpu.dot_dimension_numbers<[2], [1], [1], [2], [0, 0, 0, 1, 1, 2], [0], [0]>} : vector<1x64x64xbf16>, vector<1x64x16xbf16>, vector<1x64x16xf32> -> vector<1x64x16xf32>
    "tpu.trace_stop"() : () -> ()
    %c0_12 = arith.constant 0 : index
    %c0_13 = arith.constant 0 : index
    %16 = vector.load %arg7[%c0_12, %c0_13] : memref<16x32xbf16, #tpu.memory_space<vmem>>, vector<16x32xbf16>
    %17 = vector.shape_cast %15 : vector<1x64x16xf32> to vector<64x16xf32>
    %18 = arith.truncf %17 : vector<64x16xf32> to vector<64x16xbf16>
    %cst_14 = arith.constant dense<0.000000e+00> : vector<64x32xf32>
    %19 = tpu.matmul %18, %16, %cst_14 {dimension_numbers = #tpu.dot_dimension_numbers<[1], [0], [0], [1], [0, 0, 1, 1], [], []>} : vector<64x16xbf16>, vector<16x32xbf16>, vector<64x32xf32> -> vector<64x32xf32>
    %20 = vector.shape_cast %19 : vector<64x32xf32> to vector<1x64x32xf32>
    %c0_15 = arith.constant 0 : index
    %c0_16 = arith.constant 0 : index
    %21 = vector.load %arg8[%c0_15, %c0_16] : memref<1x32xf32, #tpu.memory_space<vmem>>, vector<1x32xf32>
    %22 = vector.shape_cast %21 : vector<1x32xf32> to vector<1x1x32xf32>
    %23 = vector.broadcast %22 : vector<1x1x32xf32> to vector<1x64x32xf32>
    %24 = arith.addf %20, %23 : vector<1x64x32xf32>
    %cst_17 = arith.constant 0.000000e+00 : f32
    %25 = vector.broadcast %cst_17 : f32 to vector<1x64x32xf32>
    %26 = arith.maximumf %24, %25 : vector<1x64x32xf32>
    %c0_18 = arith.constant 0 : index
    %c0_19 = arith.constant 0 : index
    %27 = vector.load %arg9[%c0_18, %c0_19] : memref<32x128xbf16, #tpu.memory_space<vmem>>, vector<32x128xbf16>
    %28 = vector.shape_cast %26 : vector<1x64x32xf32> to vector<64x32xf32>
    %29 = arith.truncf %28 : vector<64x32xf32> to vector<64x32xbf16>
    %cst_20 = arith.constant dense<0.000000e+00> : vector<64x128xf32>
    %30 = tpu.matmul %29, %27, %cst_20 {dimension_numbers = #tpu.dot_dimension_numbers<[1], [0], [0], [1], [0, 0, 1, 1], [], []>} : vector<64x32xbf16>, vector<32x128xbf16>, vector<64x128xf32> -> vector<64x128xf32>
    %31 = vector.shape_cast %30 : vector<64x128xf32> to vector<1x64x128xf32>
    %32 = arith.truncf %31 : vector<1x64x128xf32> to vector<1x64x128xbf16>
    "tpu.trace_start"() <{level = 10 : i32, message = "bmk,bkn->bmn"}> : () -> ()
    %cst_21 = arith.constant dense<0.000000e+00> : vector<1x64x128xf32>
    %33 = tpu.matmul %0, %32, %cst_21 {dimension_numbers = #tpu.dot_dimension_numbers<[2], [1], [1], [2], [0, 0, 0, 1, 1, 2], [0], [0]>} : vector<1x64x64xbf16>, vector<1x64x128xbf16>, vector<1x64x128xf32> -> vector<1x64x128xf32>
    "tpu.trace_stop"() : () -> ()
    %c0_22 = arith.constant 0 : index
    %c0_23 = arith.constant 0 : index
    %34 = vector.load %arg10[%c0_22, %c0_23] : memref<1x128xf32, #tpu.memory_space<vmem>>, vector<1x128xf32>
    %35 = vector.shape_cast %34 : vector<1x128xf32> to vector<1x1x128xf32>
    %36 = vector.broadcast %35 : vector<1x1x128xf32> to vector<1x64x128xf32>
    %37 = arith.addf %33, %36 : vector<1x64x128xf32>
    %c0_24 = arith.constant 0 : index
    %c0_25 = arith.constant 0 : index
    %c0_26 = arith.constant 0 : index
    %38 = vector.load %arg3[%c0_24, %c0_25, %c0_26] : memref<1x64x128xf32, #tpu.memory_space<vmem>>, vector<1x64x128xf32>
    %cst_27 = arith.constant 5.000000e-01 : f32
    %39 = vector.broadcast %cst_27 : f32 to vector<1x64x128xf32>
    %40 = arith.cmpf ogt, %38, %39 : vector<1x64x128xf32>
    %cst_28 = arith.constant -1.000000e+30 : f32
    %41 = vector.broadcast %cst_28 : f32 to vector<1x64x128xf32>
    %42 = arith.select %40, %37, %41 : vector<1x64x128xi1>, vector<1x64x128xf32>
    %cst_29 = arith.constant dense<0xFF800000> : vector<1x128xf32>
    %43 = vector.multi_reduction <maximumf>, %42, %cst_29 [1] : vector<1x64x128xf32> to vector<1x128xf32>
    %44 = vector.shape_cast %43 : vector<1x128xf32> to vector<1x1x128xf32>
    %cst_30 = arith.constant -5.000000e+29 : f32
    %45 = vector.broadcast %cst_30 : f32 to vector<1x1x128xf32>
    %46 = arith.cmpf ole, %44, %45 : vector<1x1x128xf32>
    %cst_31 = arith.constant 0.000000e+00 : f32
    %47 = vector.broadcast %cst_31 : f32 to vector<1x1x128xf32>
    %48 = arith.select %46, %47, %44 : vector<1x1x128xi1>, vector<1x1x128xf32>
    %c0_32 = arith.constant 0 : index
    %c0_33 = arith.constant 0 : index
    %c0_34 = arith.constant 0 : index
    %49 = vector.load %arg4[%c0_32, %c0_33, %c0_34] : memref<1x1x128xf32, #tpu.memory_space<vmem>>, vector<1x1x128xf32>
    %50 = arith.mulf %48, %49 : vector<1x1x128xf32>
    %51 = vector.shape_cast %50 : vector<1x1x128xf32> to vector<1x128xf32>
    %52 = arith.truncf %51 : vector<1x128xf32> to vector<1x128xbf16>
    %c0_35 = arith.constant 0 : index
    %c0_36 = arith.constant 0 : index
    %53 = vector.load %arg11[%c0_35, %c0_36] : memref<128x512xbf16, #tpu.memory_space<vmem>>, vector<128x512xbf16>
    %cst_37 = arith.constant dense<0.000000e+00> : vector<1x512xf32>
    %54 = tpu.matmul %52, %53, %cst_37 {dimension_numbers = #tpu.dot_dimension_numbers<[1], [0], [0], [1], [0, 0, 1, 1], [], []>} : vector<1x128xbf16>, vector<128x512xbf16>, vector<1x512xf32> -> vector<1x512xf32>
    %c0_38 = arith.constant 0 : index
    %c0_39 = arith.constant 0 : index
    %55 = vector.load %arg12[%c0_38, %c0_39] : memref<1x512xf32, #tpu.memory_space<vmem>>, vector<1x512xf32>
    %56 = arith.addf %54, %55 : vector<1x512xf32>
    %cst_40 = arith.constant 0.000000e+00 : f32
    %57 = vector.broadcast %cst_40 : f32 to vector<1x512xf32>
    %58 = arith.maximumf %56, %57 : vector<1x512xf32>
    %59 = arith.truncf %58 : vector<1x512xf32> to vector<1x512xbf16>
    %c0_41 = arith.constant 0 : index
    %c0_42 = arith.constant 0 : index
    %60 = vector.load %arg13[%c0_41, %c0_42] : memref<512x128xbf16, #tpu.memory_space<vmem>>, vector<512x128xbf16>
    %cst_43 = arith.constant dense<0.000000e+00> : vector<1x128xf32>
    %61 = tpu.matmul %59, %60, %cst_43 {dimension_numbers = #tpu.dot_dimension_numbers<[1], [0], [0], [1], [0, 0, 1, 1], [], []>} : vector<1x512xbf16>, vector<512x128xbf16>, vector<1x128xf32> -> vector<1x128xf32>
    %c0_44 = arith.constant 0 : index
    %c0_45 = arith.constant 0 : index
    %62 = vector.load %arg14[%c0_44, %c0_45] : memref<1x128xf32, #tpu.memory_space<vmem>>, vector<1x128xf32>
    %63 = arith.addf %61, %62 : vector<1x128xf32>
    %64 = vector.shape_cast %63 : vector<1x128xf32> to vector<1x1x128xf32>
    %c0_46 = arith.constant 0 : index
    %c0_47 = arith.constant 0 : index
    %c0_48 = arith.constant 0 : index
    %65 = vector.load %arg15[%c0_46, %c0_47, %c0_48] : memref<1x1x128xf32, #tpu.memory_space<vmem>>, vector<1x1x128xf32>
    tpu.vector_store %arg15[%c0_46, %c0_47, %c0_48], %64 {strides = array<i32>} : memref<1x1x128xf32, #tpu.memory_space<vmem>>, vector<1x1x128xf32>,
    return
  }
  func.func @transform_0(%arg0: i32) -> (i32, i32, i32) {
    %c0_i32 = arith.constant 0 : i32
    %c0_i32_0 = arith.constant 0 : i32
    %c0_i32_1 = arith.constant 0 : i32
    return %arg0, %c0_i32, %c0_i32_0 : i32, i32, i32
  }
  func.func @transform_1(%arg0: i32) -> (i32, i32, i32) {
    %c0_i32 = arith.constant 0 : i32
    %c0_i32_0 = arith.constant 0 : i32
    %c0_i32_1 = arith.constant 0 : i32
    return %arg0, %c0_i32, %c0_i32_0 : i32, i32, i32
  }
  func.func @transform_2(%arg0: i32) -> (i32, i32, i32) {
    %c0_i32 = arith.constant 0 : i32
    %c0_i32_0 = arith.constant 0 : i32
    %c0_i32_1 = arith.constant 0 : i32
    return %arg0, %c0_i32, %c0_i32_0 : i32, i32, i32
  }
  func.func @transform_3(%arg0: i32) -> (i32, i32, i32) {
    %c0_i32 = arith.constant 0 : i32
    %c0_i32_0 = arith.constant 0 : i32
    %c0_i32_1 = arith.constant 0 : i32
    return %arg0, %c0_i32, %c0_i32_0 : i32, i32, i32
  }
  func.func @transform_4(%arg0: i32) -> (i32, i32) {
    %c0_i32 = arith.constant 0 : i32
    %c0_i32_0 = arith.constant 0 : i32
    %c0_i32_1 = arith.constant 0 : i32
    return %c0_i32, %c0_i32_0 : i32, i32
  }
  func.func @transform_5(%arg0: i32) -> (i32, i32) {
    %c0_i32 = arith.constant 0 : i32
    %c0_i32_0 = arith.constant 0 : i32
    %c0_i32_1 = arith.constant 0 : i32
    return %c0_i32, %c0_i32_0 : i32, i32
  }
  func.func @transform_6(%arg0: i32) -> (i32, i32) {
    %c0_i32 = arith.constant 0 : i32
    %c0_i32_0 = arith.constant 0 : i32
    %c0_i32_1 = arith.constant 0 : i32
    return %c0_i32, %c0_i32_0 : i32, i32
  }
  func.func @transform_7(%arg0: i32) -> (i32, i32) {
    %c0_i32 = arith.constant 0 : i32
    %c0_i32_0 = arith.constant 0 : i32
    %c0_i32_1 = arith.constant 0 : i32
    return %c0_i32, %c0_i32_0 : i32, i32
  }
  func.func @transform_8(%arg0: i32) -> (i32, i32) {
    %c0_i32 = arith.constant 0 : i32
    %c0_i32_0 = arith.constant 0 : i32
    %c0_i32_1 = arith.constant 0 : i32
    return %c0_i32, %c0_i32_0 : i32, i32
  }
  func.func @transform_9(%arg0: i32) -> (i32, i32) {
    %c0_i32 = arith.constant 0 : i32
    %c0_i32_0 = arith.constant 0 : i32
    %c0_i32_1 = arith.constant 0 : i32
    return %c0_i32, %c0_i32_0 : i32, i32
  }
  func.func @transform_10(%arg0: i32) -> (i32, i32) {
    %c0_i32 = arith.constant 0 : i32
    %c0_i32_0 = arith.constant 0 : i32
    %c0_i32_1 = arith.constant 0 : i32
    return %c0_i32, %c0_i32_0 : i32, i32
  }
  func.func @transform_11(%arg0: i32) -> (i32, i32) {
    %c0_i32 = arith.constant 0 : i32
    %c0_i32_0 = arith.constant 0 : i32
    %c0_i32_1 = arith.constant 0 : i32
    return %c0_i32, %c0_i32_0 : i32, i32
  }
  func.func @transform_12(%arg0: i32) -> (i32, i32) {
    %c0_i32 = arith.constant 0 : i32
    %c0_i32_0 = arith.constant 0 : i32
    %c0_i32_1 = arith.constant 0 : i32
    return %c0_i32, %c0_i32_0 : i32, i32
  }
  func.func @transform_13(%arg0: i32) -> (i32, i32) {
    %c0_i32 = arith.constant 0 : i32
    %c0_i32_0 = arith.constant 0 : i32
    %c0_i32_1 = arith.constant 0 : i32
    return %c0_i32, %c0_i32_0 : i32, i32
  }
  func.func @transform_14(%arg0: i32) -> (i32, i32, i32) {
    %c0_i32 = arith.constant 0 : i32
    %c0_i32_0 = arith.constant 0 : i32
    %c0_i32_1 = arith.constant 0 : i32
    return %arg0, %c0_i32, %c0_i32_0 : i32, i32, i32
  }
}

</mosaic_0001>

<llo_original>
// kernel: tpu_custom_call.1
$region0: #{tpu_custom_call.1}
  #allocation0 [shape = 'u32[]', space=smem, size = 0x4, offset = 0x4, fixed_abs, tag = 'smem constant byte address 0x4 - core index']
  #allocation1 [shape = 'u32[144,128]{1,0:T(1,128)}', space=vmem, size = 0x12000, scoped, tag = 'internal scratch']
  %s0 = inlined_call_operand.vmem [shape: bf16[2,64,8], index: 0, kind: input, shape index: {}]
  %s1 = inlined_call_operand.vmem [shape: bf16[2,64,64], index: 1, kind: input, shape index: {}]
  %s2 = inlined_call_operand.hbm [shape: f32[2,64,128], index: 2, kind: input, shape index: {}]
  %s3 = inlined_call_operand.vmem [shape: f32[2,1,128], index: 3, kind: input, shape index: {}]
  %s4 = inlined_call_operand.hbm [shape: bf16[8,16], index: 4, kind: input, shape index: {}]
  %s5 = inlined_call_operand.hbm [shape: f32[1,16], index: 5, kind: input, shape index: {}]
  %s6 = inlined_call_operand.vmem [shape: bf16[16,32], index: 6, kind: input, shape index: {}]
  %s7 = inlined_call_operand.vmem [shape: f32[1,32], index: 7, kind: input, shape index: {}]
  %s8 = inlined_call_operand.vmem [shape: bf16[32,128], index: 8, kind: input, shape index: {}]
  %s9 = inlined_call_operand.vmem [shape: f32[1,128], index: 9, kind: input, shape index: {}]
  %s10 = inlined_call_operand.hbm [shape: bf16[128,512], index: 10, kind: input, shape index: {}]
  %s11 = inlined_call_operand.vmem [shape: f32[1,512], index: 11, kind: input, shape index: {}]
  %s12 = inlined_call_operand.hbm [shape: bf16[512,128], index: 12, kind: input, shape index: {}]
  %s13 = inlined_call_operand.vmem [shape: f32[1,128], index: 13, kind: input, shape index: {}]
  %s14 = inlined_call_operand.hbm [shape: f32[2,1,128], index: 14, kind: output, shape index: {}]
  %s15 = sld [smem:[#allocation0]]
  $region109: #{tpu_custom_call.1} parent=0
    _
  %s17 = ssub.s32 1, %s15
  %s18 = scalar_select 0, %s17, %s15
  $region1: #{tpu_custom_call.1} parent=0
    #allocation2 [shape = 'u8[65536]{0}', space=vmem, size = 0x10000, scoped, tag = 'input window, operand 2']
    #allocation3 [shape = 's32[2]{0}', space=sflag, size = 0x8, scoped, tag = 'scoped memory for tpu_custom_call.1']
    #allocation4 [shape = 's32[2]{0}', space=sflag, size = 0x8, scoped, tag = 'scoped memory for tpu_custom_call.1']
    #allocation5 [shape = 'u8[2048]{0}', space=vmem, size = 0x800, scoped, tag = 'input window, operand 4, single buffered']
    #allocation6 [shape = 's32[1]{0}', space=sflag, size = 0x4, scoped, tag = 'scoped memory for tpu_custom_call.1']
    #allocation7 [shape = 'u8[512]{0}', space=vmem, size = 0x400, scoped, tag = 'input window, operand 5, single buffered']
    #allocation8 [shape = 'u8[131072]{0}', space=vmem, size = 0x20000, scoped, tag = 'input window, operand 10, single buffered']
    #allocation9 [shape = 's32[1]{0}', space=sflag, size = 0x4, scoped, tag = 'scoped memory for tpu_custom_call.1']
    #allocation10 [shape = 'u8[131072]{0}', space=vmem, size = 0x20000, scoped, tag = 'input window, operand 12, single buffered']
    #allocation11 [shape = 'u8[1024]{0}', space=vmem, size = 0x400, scoped, tag = 'output window, operand 0']
    %19 = vsyncpa [#allocation3], 0
    %s20 = scalar_lea.sflag [#allocation3], 1
    %21 = vsyncpa %s20, 0
    %22 = vsyncpa [#allocation6], 0
    %23 = vsyncpa [#allocation9], 0
    %24 = vsyncpa [#allocation4], 0
    %s25 = scalar_lea.sflag [#allocation4], 1
    %26 = vsyncpa %s25, 0
    loop: start=0, step=1, limit=4
    $region2: #{tpu_custom_call.1} parent=1 // loop_pre_header
      _
    $region3: #{tpu_custom_call.1} parent=1 // loop_header
      %s28 = sphi 0, %s32
      %p29 = scmp.ge.s32.totalorder %s28, 4
      %s38 = sphi 0, %s40
      %s41 = sphi 0, %s38
      %s42 = sphi 0, %s41
      %s58 = sphi 0, %s42
      %s64 = sphi 0, %s66
      %s67 = sphi 0, %s64
      %s68 = sphi 0, %s67
      %s84 = sphi 0, %s68
      %s90 = sphi 0, %s92
      %s93 = sphi 0, %s90
      %s94 = sphi 0, %s93
      %s110 = sphi 0, %s94
      %s116 = sphi 0, %s118
      %s119 = sphi 0, %s116
      %s120 = sphi 0, %s119
      %s136 = sphi 0, %s120
      %s140 = sphi 0, %s140
      %s142 = sphi 0, %s140
      %s143 = sphi 0, %s142
      %s157 = sphi 0, %s143
      %s161 = sphi 0, %s161
      %s163 = sphi 0, %s161
      %s164 = sphi 0, %s163
      %s178 = sphi 0, %s164
      %s182 = sphi 0, %s182
      %s184 = sphi 0, %s182
      %s185 = sphi 0, %s184
      %s199 = sphi 0, %s185
      %s203 = sphi 0, %s203
      %s205 = sphi 0, %s203
      %s206 = sphi 0, %s205
      %s220 = sphi 0, %s206
      %s224 = sphi 0, %s224
      %s226 = sphi 0, %s224
      %s227 = sphi 0, %s226
      %s241 = sphi 0, %s227
      %s245 = sphi 0, %s245
      %s247 = sphi 0, %s245
      %s248 = sphi 0, %s247
      %s262 = sphi 0, %s248
      %s266 = sphi 0, %s266
      %s268 = sphi 0, %s266
      %s269 = sphi 0, %s268
      %s283 = sphi 0, %s269
      %s287 = sphi 0, %s287
      %s289 = sphi 0, %s287
      %s290 = sphi 0, %s289
      %s304 = sphi 0, %s290
      %s308 = sphi 0, %s308
      %s310 = sphi 0, %s308
      %s311 = sphi 0, %s310
      %s325 = sphi 0, %s311
      %s329 = sphi 0, %s329
      %s331 = sphi 0, %s329
      %s332 = sphi 0, %s331
      %s346 = sphi 0, %s332
      %s352 = sphi 0, %s354
      %s355 = sphi 0, %s352
      %s356 = sphi 0, %s355
      %s372 = sphi 0, %s356
    $region4: #{tpu_custom_call.1} parent=1 // loop_header_branch
      %31 = sbr.rel (%p29) target = $region8
    $region5: #{tpu_custom_call.1} parent=1 // loop_body
      %s33 = ssub.s32 %s28, 1
      %s34 = ssub.s32 %s28, 2
      %s35 = sadd.s32 %s28, 1
      %s36 = ssub.s32 %s28, %s35
      %p37 = scmp.eq.s32.totalorder %s36, 0
      %s39 = sadd.s32 %s38, 1
      %s40 = scalar_select %p37, %s38, %s39
      %p43 = pneg %p37
      %p44 = scmp.eq.s32.totalorder %s28, 1
      %p45 = por %p43, %p44
      %p46 = scmp.ne.s32.totalorder %s38, %s41
      %p47 = scmp.eq.s32.totalorder %s28, 0
      %p48 = por %p46, %p47
      %p49 = scmp.ne.s32.totalorder %s38, %s41
      %p50 = scmp.eq.s32.totalorder %s33, 1
      %p51 = por %p49, %p50
      %p52 = scmp.ne.s32.totalorder %s41, %s42
      %p53 = scmp.eq.s32.totalorder %s33, 0
      %p54 = por %p52, %p53
      %p55 = scmp.ne.s32.totalorder %s41, %s42
      %p56 = scmp.eq.s32.totalorder %s34, 1
      %p57 = por %p55, %p56
      %p59 = scmp.ne.s32.totalorder %s42, %s58
      %p60 = scmp.eq.s32.totalorder %s34, 0
      %p61 = por %p59, %p60
      %s62 = ssub.s32 %s28, %s35
      %p63 = scmp.eq.s32.totalorder %s62, 0
      %s65 = sadd.s32 %s64, 1
      %s66 = scalar_select %p63, %s64, %s65
      %p69 = pneg %p63
      %p70 = scmp.eq.s32.totalorder %s28, 1
      %p71 = por %p69, %p70
      %p72 = scmp.ne.s32.totalorder %s64, %s67
      %p73 = scmp.eq.s32.totalorder %s28, 0
      %p74 = por %p72, %p73
      %p75 = scmp.ne.s32.totalorder %s64, %s67
      %p76 = scmp.eq.s32.totalorder %s33, 1
      %p77 = por %p75, %p76
      %p78 = scmp.ne.s32.totalorder %s67, %s68
      %p79 = scmp.eq.s32.totalorder %s33, 0
      %p80 = por %p78, %p79
      %p81 = scmp.ne.s32.totalorder %s67, %s68
      %p82 = scmp.eq.s32.totalorder %s34, 1
      %p83 = por %p81, %p82
      %p85 = scmp.ne.s32.totalorder %s68, %s84
      %p86 = scmp.eq.s32.totalorder %s34, 0
      %p87 = por %p85, %p86
      %s88 = ssub.s32 %s28, %s35
      %p89 = scmp.eq.s32.totalorder %s88, 0
      %s91 = sadd.s32 %s90, 1
      %s92 = scalar_select %p89, %s90, %s91
      %p95 = pneg %p89
      %p96 = scmp.eq.s32.totalorder %s28, 1
      %p97 = por %p95, %p96
      %p98 = scmp.ne.s32.totalorder %s90, %s93
      %p99 = scmp.eq.s32.totalorder %s28, 0
      %p100 = por %p98, %p99
      %p101 = scmp.ne.s32.totalorder %s90, %s93
      %p102 = scmp.eq.s32.totalorder %s33, 1
      %p103 = por %p101, %p102
      %p104 = scmp.ne.s32.totalorder %s93, %s94
      %p105 = scmp.eq.s32.totalorder %s33, 0
      %p106 = por %p104, %p105
      %p107 = scmp.ne.s32.totalorder %s93, %s94
      %p108 = scmp.eq.s32.totalorder %s34, 1
      %p109 = por %p107, %p108
      %p111 = scmp.ne.s32.totalorder %s94, %s110
      %p112 = scmp.eq.s32.totalorder %s34, 0
      %p113 = por %p111, %p112
      %s114 = ssub.s32 %s28, %s35
      %p115 = scmp.eq.s32.totalorder %s114, 0
      %s117 = sadd.s32 %s116, 1
      %s118 = scalar_select %p115, %s116, %s117
      %p121 = pneg %p115
      %p122 = scmp.eq.s32.totalorder %s28, 1
      %p123 = por %p121, %p122
      %p124 = scmp.ne.s32.totalorder %s116, %s119
      %p125 = scmp.eq.s32.totalorder %s28, 0
      %p126 = por %p124, %p125
      %p127 = scmp.ne.s32.totalorder %s116, %s119
      %p128 = scmp.eq.s32.totalorder %s33, 1
      %p129 = por %p127, %p128
      %p130 = scmp.ne.s32.totalorder %s119, %s120
      %p131 = scmp.eq.s32.totalorder %s33, 0
      %p132 = por %p130, %p131
      %p133 = scmp.ne.s32.totalorder %s119, %s120
      %p134 = scmp.eq.s32.totalorder %s34, 1
      %p135 = por %p133, %p134
      %p137 = scmp.ne.s32.totalorder %s120, %s136
      %p138 = scmp.eq.s32.totalorder %s34, 0
      %p139 = por %p137, %p138
      %s141 = sadd.s32 %s140, 1
      %p144 = scmp.eq.s32.totalorder %s28, 1
      %p145 = scmp.ne.s32.totalorder %s140, %s142
      %p146 = scmp.eq.s32.totalorder %s28, 0
      %p147 = por %p145, %p146
      %p148 = scmp.ne.s32.totalorder %s140, %s142
      %p149 = scmp.eq.s32.totalorder %s33, 1
      %p150 = por %p148, %p149
      %p151 = scmp.ne.s32.totalorder %s142, %s143
      %p152 = scmp.eq.s32.totalorder %s33, 0
      %p153 = por %p151, %p152
      %p154 = scmp.ne.s32.totalorder %s142, %s143
      %p155 = scmp.eq.s32.totalorder %s34, 1
      %p156 = por %p154, %p155
      %p158 = scmp.ne.s32.totalorder %s143, %s157
      %p159 = scmp.eq.s32.totalorder %s34, 0
      %p160 = por %p158, %p159
      %s162 = sadd.s32 %s161, 1
      %p165 = scmp.eq.s32.totalorder %s28, 1
      %p166 = scmp.ne.s32.totalorder %s161, %s163
      %p167 = scmp.eq.s32.totalorder %s28, 0
      %p168 = por %p166, %p167
      %p169 = scmp.ne.s32.totalorder %s161, %s163
      %p170 = scmp.eq.s32.totalorder %s33, 1
      %p171 = por %p169, %p170
      %p172 = scmp.ne.s32.totalorder %s163, %s164
      %p173 = scmp.eq.s32.totalorder %s33, 0
      %p174 = por %p172, %p173
      %p175 = scmp.ne.s32.totalorder %s163, %s164
      %p176 = scmp.eq.s32.totalorder %s34, 1
      %p177 = por %p175, %p176
      %p179 = scmp.ne.s32.totalorder %s164, %s178
      %p180 = scmp.eq.s32.totalorder %s34, 0
      %p181 = por %p179, %p180
      %s183 = sadd.s32 %s182, 1
      %p186 = scmp.eq.s32.totalorder %s28, 1
      %p187 = scmp.ne.s32.totalorder %s182, %s184
      %p188 = scmp.eq.s32.totalorder %s28, 0
      %p189 = por %p187, %p188
      %p190 = scmp.ne.s32.totalorder %s182, %s184
      %p191 = scmp.eq.s32.totalorder %s33, 1
      %p192 = por %p190, %p191
      %p193 = scmp.ne.s32.totalorder %s184, %s185
      %p194 = scmp.eq.s32.totalorder %s33, 0
      %p195 = por %p193, %p194
      %p196 = scmp.ne.s32.totalorder %s184, %s185
      %p197 = scmp.eq.s32.totalorder %s34, 1
      %p198 = por %p196, %p197
      %p200 = scmp.ne.s32.totalorder %s185, %s199
      %p201 = scmp.eq.s32.totalorder %s34, 0
      %p202 = por %p200, %p201
      %s204 = sadd.s32 %s203, 1
      %p207 = scmp.eq.s32.totalorder %s28, 1
      %p208 = scmp.ne.s32.totalorder %s203, %s205
      %p209 = scmp.eq.s32.totalorder %s28, 0
      %p210 = por %p208, %p209
      %p211 = scmp.ne.s32.totalorder %s203, %s205
      %p212 = scmp.eq.s32.totalorder %s33, 1
      %p213 = por %p211, %p212
      %p214 = scmp.ne.s32.totalorder %s205, %s206
      %p215 = scmp.eq.s32.totalorder %s33, 0
      %p216 = por %p214, %p215
      %p217 = scmp.ne.s32.totalorder %s205, %s206
      %p218 = scmp.eq.s32.totalorder %s34, 1
      %p219 = por %p217, %p218
      %p221 = scmp.ne.s32.totalorder %s206, %s220
      %p222 = scmp.eq.s32.totalorder %s34, 0
      %p223 = por %p221, %p222
      %s225 = sadd.s32 %s224, 1
      %p228 = scmp.eq.s32.totalorder %s28, 1
      %p229 = scmp.ne.s32.totalorder %s224, %s226
      %p230 = scmp.eq.s32.totalorder %s28, 0
      %p231 = por %p229, %p230
      %p232 = scmp.ne.s32.totalorder %s224, %s226
      %p233 = scmp.eq.s32.totalorder %s33, 1
      %p234 = por %p232, %p233
      %p235 = scmp.ne.s32.totalorder %s226, %s227
      %p236 = scmp.eq.s32.totalorder %s33, 0
      %p237 = por %p235, %p236
      %p238 = scmp.ne.s32.totalorder %s226, %s227
      %p239 = scmp.eq.s32.totalorder %s34, 1
      %p240 = por %p238, %p239
      %p242 = scmp.ne.s32.totalorder %s227, %s241
      %p243 = scmp.eq.s32.totalorder %s34, 0
      %p244 = por %p242, %p243
      %s246 = sadd.s32 %s245, 1
      %p249 = scmp.eq.s32.totalorder %s28, 1
      %p250 = scmp.ne.s32.totalorder %s245, %s247
      %p251 = scmp.eq.s32.totalorder %s28, 0
      %p252 = por %p250, %p251
      %p253 = scmp.ne.s32.totalorder %s245, %s247
      %p254 = scmp.eq.s32.totalorder %s33, 1
      %p255 = por %p253, %p254
      %p256 = scmp.ne.s32.totalorder %s247, %s248
      %p257 = scmp.eq.s32.totalorder %s33, 0
      %p258 = por %p256, %p257
      %p259 = scmp.ne.s32.totalorder %s247, %s248
      %p260 = scmp.eq.s32.totalorder %s34, 1
      %p261 = por %p259, %p260
      %p263 = scmp.ne.s32.totalorder %s248, %s262
      %p264 = scmp.eq.s32.totalorder %s34, 0
      %p265 = por %p263, %p264
      %s267 = sadd.s32 %s266, 1
      %p270 = scmp.eq.s32.totalorder %s28, 1
      %p271 = scmp.ne.s32.totalorder %s266, %s268
      %p272 = scmp.eq.s32.totalorder %s28, 0
      %p273 = por %p271, %p272
      %p274 = scmp.ne.s32.totalorder %s266, %s268
      %p275 = scmp.eq.s32.totalorder %s33, 1
      %p276 = por %p274, %p275
      %p277 = scmp.ne.s32.totalorder %s268, %s269
      %p278 = scmp.eq.s32.totalorder %s33, 0
      %p279 = por %p277, %p278
      %p280 = scmp.ne.s32.totalorder %s268, %s269
      %p281 = scmp.eq.s32.totalorder %s34, 1
      %p282 = por %p280, %p281
      %p284 = scmp.ne.s32.totalorder %s269, %s283
      %p285 = scmp.eq.s32.totalorder %s34, 0
      %p286 = por %p284, %p285
      %s288 = sadd.s32 %s287, 1
      %p291 = scmp.eq.s32.totalorder %s28, 1
      %p292 = scmp.ne.s32.totalorder %s287, %s289
      %p293 = scmp.eq.s32.totalorder %s28, 0
      %p294 = por %p292, %p293
      %p295 = scmp.ne.s32.totalorder %s287, %s289
      %p296 = scmp.eq.s32.totalorder %s33, 1
      %p297 = por %p295, %p296
      %p298 = scmp.ne.s32.totalorder %s289, %s290
      %p299 = scmp.eq.s32.totalorder %s33, 0
      %p300 = por %p298, %p299
      %p301 = scmp.ne.s32.totalorder %s289, %s290
      %p302 = scmp.eq.s32.totalorder %s34, 1
      %p303 = por %p301, %p302
      %p305 = scmp.ne.s32.totalorder %s290, %s304
      %p306 = scmp.eq.s32.totalorder %s34, 0
      %p307 = por %p305, %p306
      %s309 = sadd.s32 %s308, 1
      %p312 = scmp.eq.s32.totalorder %s28, 1
      %p313 = scmp.ne.s32.totalorder %s308, %s310
      %p314 = scmp.eq.s32.totalorder %s28, 0
      %p315 = por %p313, %p314
      %p316 = scmp.ne.s32.totalorder %s308, %s310
      %p317 = scmp.eq.s32.totalorder %s33, 1
      %p318 = por %p316, %p317
      %p319 = scmp.ne.s32.totalorder %s310, %s311
      %p320 = scmp.eq.s32.totalorder %s33, 0
      %p321 = por %p319, %p320
      %p322 = scmp.ne.s32.totalorder %s310, %s311
      %p323 = scmp.eq.s32.totalorder %s34, 1
      %p324 = por %p322, %p323
      %p326 = scmp.ne.s32.totalorder %s311, %s325
      %p327 = scmp.eq.s32.totalorder %s34, 0
      %p328 = por %p326, %p327
      %s330 = sadd.s32 %s329, 1
      %p333 = scmp.eq.s32.totalorder %s28, 1
      %p334 = scmp.ne.s32.totalorder %s329, %s331
      %p335 = scmp.eq.s32.totalorder %s28, 0
      %p336 = por %p334, %p335
      %p337 = scmp.ne.s32.totalorder %s329, %s331
      %p338 = scmp.eq.s32.totalorder %s33, 1
      %p339 = por %p337, %p338
      %p340 = scmp.ne.s32.totalorder %s331, %s332
      %p341 = scmp.eq.s32.totalorder %s33, 0
      %p342 = por %p340, %p341
      %p343 = scmp.ne.s32.totalorder %s331, %s332
      %p344 = scmp.eq.s32.totalorder %s34, 1
      %p345 = por %p343, %p344
      %p347 = scmp.ne.s32.totalorder %s332, %s346
      %p348 = scmp.eq.s32.totalorder %s34, 0
      %p349 = por %p347, %p348
      %s350 = ssub.s32 %s28, %s35
      %p351 = scmp.eq.s32.totalorder %s350, 0
      %s353 = sadd.s32 %s352, 1
      %s354 = scalar_select %p351, %s352, %s353
      %p357 = pneg %p351
      %p358 = scmp.eq.s32.totalorder %s28, 1
      %p359 = por %p357, %p358
      %p360 = scmp.ne.s32.totalorder %s352, %s355
      %p361 = scmp.eq.s32.totalorder %s28, 0
      %p362 = por %p360, %p361
      %p363 = scmp.ne.s32.totalorder %s352, %s355
      %p364 = scmp.eq.s32.totalorder %s33, 1
      %p365 = por %p363, %p364
      %p366 = scmp.ne.s32.totalorder %s355, %s356
      %p367 = scmp.eq.s32.totalorder %s33, 0
      %p368 = por %p366, %p367
      %p369 = scmp.ne.s32.totalorder %s355, %s356
      %p370 = scmp.eq.s32.totalorder %s34, 1
      %p371 = por %p369, %p370
      %p373 = scmp.ne.s32.totalorder %s356, %s372
      %p374 = scmp.eq.s32.totalorder %s34, 0
      %p375 = por %p373, %p374
      %p376 = scmp.le.s32.totalorder 1, %s28
      %p377 = scmp.lt.s32.totalorder %s28, 3
      %p378 = pnand %p376, %p377
      %p379 = pneg %p378
      // Predicated region
      $region9: #{tpu_custom_call.1} parent=5 // pred_check
        _
      $region10: #{tpu_custom_call.1} parent=5 // pred_check_branch
        %381 = sbr.rel (%p378) target = $region12
      $region11: #{tpu_custom_call.1} parent=5 // pred_region
        %s382 = ssub.s32 %s28, 1
        // Predicated region
        $region13: #{tpu_custom_call.1} parent=11 // pred_check
          %p383 = pneg %p153
        $region14: #{tpu_custom_call.1} parent=11 // pred_check_branch
          %385 = sbr.rel (%p383) target = $region16
        $region15: #{tpu_custom_call.1} parent=11 // pred_region
          %s387 = ssub.s32 64, 64
          %388 = vsyncadd [#allocation6], %s387
          %s390 = sshll.u32 [#allocation5], 4
          %s391 = int_to_ptr.vmem [resolvable:$true] %s390
          %393 = dma.hbm_to_vmem [thread:$0]  %s4, 64, %s391, [#allocation6]
        $region16: #{tpu_custom_call.1} parent=11 // pred_fallthru
          _
        // Predicated region
        $region17: #{tpu_custom_call.1} parent=11 // pred_check
          %p394 = pneg %p174
        $region18: #{tpu_custom_call.1} parent=11 // pred_check_branch
          %396 = sbr.rel (%p394) target = $region20
        $region19: #{tpu_custom_call.1} parent=11 // pred_region
          %s398 = ssub.s32 16, 16
          %399 = vsyncadd [#allocation6], %s398
          %s401 = sshll.u32 [#allocation7], 4
          %s402 = int_to_ptr.vmem [resolvable:$true] %s401
          %404 = dma.hbm_to_vmem [thread:$0]  %s5, 16, %s402, [#allocation6]
        $region20: #{tpu_custom_call.1} parent=11 // pred_fallthru
          _
        // Predicated region
        $region21: #{tpu_custom_call.1} parent=11 // pred_check
          %p405 = pneg %p195
        $region22: #{tpu_custom_call.1} parent=11 // pred_check_branch
          %407 = sbr.rel (%p405) target = $region24
        $region23: #{tpu_custom_call.1} parent=11 // pred_region
          _
        $region24: #{tpu_custom_call.1} parent=11 // pred_fallthru
          _
        // Predicated region
        $region25: #{tpu_custom_call.1} parent=11 // pred_check
          %p408 = pneg %p216
        $region26: #{tpu_custom_call.1} parent=11 // pred_check_branch
          %410 = sbr.rel (%p408) target = $region28
        $region27: #{tpu_custom_call.1} parent=11 // pred_region
          _
        $region28: #{tpu_custom_call.1} parent=11 // pred_fallthru
          _
        // Predicated region
        $region29: #{tpu_custom_call.1} parent=11 // pred_check
          %p411 = pneg %p237
        $region30: #{tpu_custom_call.1} parent=11 // pred_check_branch
          %413 = sbr.rel (%p411) target = $region32
        $region31: #{tpu_custom_call.1} parent=11 // pred_region
          _
        $region32: #{tpu_custom_call.1} parent=11 // pred_fallthru
          _
        // Predicated region
        $region33: #{tpu_custom_call.1} parent=11 // pred_check
          %p414 = pneg %p258
        $region34: #{tpu_custom_call.1} parent=11 // pred_check_branch
          %416 = sbr.rel (%p414) target = $region36
        $region35: #{tpu_custom_call.1} parent=11 // pred_region
          _
        $region36: #{tpu_custom_call.1} parent=11 // pred_fallthru
          _
        // Predicated region
        $region37: #{tpu_custom_call.1} parent=11 // pred_check
          %p417 = pneg %p279
        $region38: #{tpu_custom_call.1} parent=11 // pred_check_branch
          %419 = sbr.rel (%p417) target = $region40
        $region39: #{tpu_custom_call.1} parent=11 // pred_region
          %s421 = ssub.s32 4096, 4096
          %422 = vsyncadd [#allocation9], %s421
          %s423 = sshll.u32 [#allocation8], 4
          %s424 = int_to_ptr.vmem [resolvable:$true] %s423
          %429 = dma.hbm_to_vmem [thread:$0]  %s10, 4096, %s424, [#allocation9], 256, 256, 16
        $region40: #{tpu_custom_call.1} parent=11 // pred_fallthru
          _
        // Predicated region
        $region41: #{tpu_custom_call.1} parent=11 // pred_check
          %p430 = pneg %p300
        $region42: #{tpu_custom_call.1} parent=11 // pred_check_branch
          %432 = sbr.rel (%p430) target = $region44
        $region43: #{tpu_custom_call.1} parent=11 // pred_region
          _
        $region44: #{tpu_custom_call.1} parent=11 // pred_fallthru
          _
        // Predicated region
        $region45: #{tpu_custom_call.1} parent=11 // pred_check
          %p433 = pneg %p321
        $region46: #{tpu_custom_call.1} parent=11 // pred_check_branch
          %435 = sbr.rel (%p433) target = $region48
        $region47: #{tpu_custom_call.1} parent=11 // pred_region
          %s437 = ssub.s32 4096, 4096
          %438 = vsyncadd [#allocation9], %s437
          %s439 = sshll.u32 [#allocation10], 4
          %s440 = int_to_ptr.vmem [resolvable:$true] %s439
          %445 = dma.hbm_to_vmem [thread:$0]  %s12, 4096, %s440, [#allocation9], 64, 64, 4
        $region48: #{tpu_custom_call.1} parent=11 // pred_fallthru
          _
        // Predicated region
        $region49: #{tpu_custom_call.1} parent=11 // pred_check
          %p446 = pneg %p342
        $region50: #{tpu_custom_call.1} parent=11 // pred_check_branch
          %448 = sbr.rel (%p446) target = $region52
        $region51: #{tpu_custom_call.1} parent=11 // pred_region
          _
        $region52: #{tpu_custom_call.1} parent=11 // pred_fallthru
          _
      $region12: #{tpu_custom_call.1} parent=5 // pred_fallthru
        _
      %p449 = scmp.lt.s32.totalorder %s28, 2
      // Predicated region
      $region53: #{tpu_custom_call.1} parent=5 // pred_check
        %p450 = pneg %p449
      $region54: #{tpu_custom_call.1} parent=5 // pred_check_branch
        %452 = sbr.rel (%p450) target = $region56
      $region55: #{tpu_custom_call.1} parent=5 // pred_region
        // Predicated region
        $region57: #{tpu_custom_call.1} parent=55 // pred_check
          %p453 = pneg %p48
        $region58: #{tpu_custom_call.1} parent=55 // pred_check_branch
          %455 = sbr.rel (%p453) target = $region60
        $region59: #{tpu_custom_call.1} parent=55 // pred_region
          %p456 = scmp.lt.s32.totalorder %s28, 1
          %s457 = scalar_select %p456, %s28, 1
          %s458 = smul.addr %s457, 8
          %s459 = smul.addr %s458, 4
          %s460 = scalar_lea.vmem %s0, %s459
        $region60: #{tpu_custom_call.1} parent=55 // pred_fallthru
          _
        // Predicated region
        $region61: #{tpu_custom_call.1} parent=55 // pred_check
          %p461 = pneg %p74
        $region62: #{tpu_custom_call.1} parent=55 // pred_check_branch
          %463 = sbr.rel (%p461) target = $region64
        $region63: #{tpu_custom_call.1} parent=55 // pred_region
          %p464 = scmp.lt.s32.totalorder %s28, 1
          %s465 = scalar_select %p464, %s28, 1
          %s466 = smul.addr %s465, 8
          %s467 = smul.addr %s466, 4
          %s468 = scalar_lea.vmem %s1, %s467
        $region64: #{tpu_custom_call.1} parent=55 // pred_fallthru
          _
        // Predicated region
        $region65: #{tpu_custom_call.1} parent=55 // pred_check
          %p469 = pneg %p100
        $region66: #{tpu_custom_call.1} parent=55 // pred_check_branch
          %471 = sbr.rel (%p469) target = $region68
        $region67: #{tpu_custom_call.1} parent=55 // pred_region
          %s472 = sand.u32 %s90, 1
          %s473 = scalar_lea.sflag [#allocation3], %s472
          %s474 = sand.u32 %s90, 1
          %s475 = smul.addr %s474, 64
          %s476 = scalar_lea.vmem [#allocation2], %s475
          %s478 = ssub.s32 1024, 1024
          %479 = vsyncadd %s473, %s478
          %s480 = smul.addr %s28, 8
          %s481 = smul.addr %s480, 128
          %s482 = scalar_lea.hbm %s2, %s481
          %s483 = sshll.u32 %s476, 4
          %s484 = int_to_ptr.vmem [resolvable:$true] %s483
          %489 = dma.hbm_to_vmem [thread:$0]  %s482, 1024, %s484, %s473, 128, 128, 8
        $region68: #{tpu_custom_call.1} parent=55 // pred_fallthru
          _
        // Predicated region
        $region69: #{tpu_custom_call.1} parent=55 // pred_check
          %p490 = pneg %p126
        $region70: #{tpu_custom_call.1} parent=55 // pred_check_branch
          %492 = sbr.rel (%p490) target = $region72
        $region71: #{tpu_custom_call.1} parent=55 // pred_region
          %p493 = scmp.lt.s32.totalorder %s28, 1
          %s494 = scalar_select %p493, %s28, 1
          %s495 = scalar_lea.vmem %s3, %s494
        $region72: #{tpu_custom_call.1} parent=55 // pred_fallthru
          _
      $region56: #{tpu_custom_call.1} parent=5 // pred_fallthru
        _
      %p496 = scmp.le.s32.totalorder 1, %s28
      %p497 = scmp.lt.s32.totalorder %s28, 3
      %p498 = pnand %p496, %p497
      %p499 = pneg %p498
      // Predicated region
      $region73: #{tpu_custom_call.1} parent=5 // pred_check
        _
      $region74: #{tpu_custom_call.1} parent=5 // pred_check_branch
        %501 = sbr.rel (%p498) target = $region76
      $region75: #{tpu_custom_call.1} parent=5 // pred_region
        %s502 = ssub.s32 %s28, 1
        %s503 = sand.u32 %s93, 1
        %s504 = scalar_lea.sflag [#allocation3], %s503
        %s505 = sand.u32 %s93, 1
        %s506 = smul.addr %s505, 64
        %s507 = scalar_lea.vmem [#allocation2], %s506
        // Predicated region
        $region77: #{tpu_custom_call.1} parent=75 // pred_check
          %p508 = pneg %p106
        $region78: #{tpu_custom_call.1} parent=75 // pred_check_branch
          %510 = sbr.rel (%p508) target = $region80
        $region79: #{tpu_custom_call.1} parent=75 // pred_region
          %511 = dma.done %s504, 1024
        $region80: #{tpu_custom_call.1} parent=75 // pred_fallthru
          _
        // Predicated region
        $region81: #{tpu_custom_call.1} parent=75 // pred_check
          %p512 = pneg %p153
        $region82: #{tpu_custom_call.1} parent=75 // pred_check_branch
          %514 = sbr.rel (%p512) target = $region84
        $region83: #{tpu_custom_call.1} parent=75 // pred_region
          %515 = dma.done [#allocation6], 64
        $region84: #{tpu_custom_call.1} parent=75 // pred_fallthru
          _
        // Predicated region
        $region85: #{tpu_custom_call.1} parent=75 // pred_check
          %p516 = pneg %p174
        $region86: #{tpu_custom_call.1} parent=75 // pred_check_branch
          %518 = sbr.rel (%p516) target = $region88
        $region87: #{tpu_custom_call.1} parent=75 // pred_region
          %519 = dma.done [#allocation6], 16
        $region88: #{tpu_custom_call.1} parent=75 // pred_fallthru
          _
        // Predicated region
        $region89: #{tpu_custom_call.1} parent=75 // pred_check
          %p520 = pneg %p279
        $region90: #{tpu_custom_call.1} parent=75 // pred_check_branch
          %522 = sbr.rel (%p520) target = $region92
        $region91: #{tpu_custom_call.1} parent=75 // pred_region
          %523 = dma.done [#allocation9], 4096
        $region92: #{tpu_custom_call.1} parent=75 // pred_fallthru
          _
        // Predicated region
        $region93: #{tpu_custom_call.1} parent=75 // pred_check
          %p524 = pneg %p321
        $region94: #{tpu_custom_call.1} parent=75 // pred_check_branch
          %526 = sbr.rel (%p524) target = $region96
        $region95: #{tpu_custom_call.1} parent=75 // pred_region
          %527 = dma.done [#allocation9], 4096
        $region96: #{tpu_custom_call.1} parent=75 // pred_fallthru
          _
        %p528 = scmp.lt.s32.totalorder %s33, 1
        %s529 = scalar_select %p528, %s33, 1
        %s530 = smul.addr %s529, 8
        %s531 = smul.addr %s530, 4
        %s532 = scalar_lea.vmem %s0, %s531
        %p533 = pneg %p54
        %p534 = pneg %p51
        %p535 = scmp.lt.s32.totalorder %s33, 1
        %s536 = scalar_select %p535, %s33, 1
        %s537 = smul.addr %s536, 8
        %s538 = smul.addr %s537, 4
        %s539 = scalar_lea.vmem %s1, %s538
        %p540 = pneg %p80
        %p541 = pneg %p77
        %s542 = sand.u32 %s93, 1
        %s543 = scalar_lea.sflag [#allocation3], %s542
        %s544 = sand.u32 %s93, 1
        %s545 = smul.addr %s544, 64
        %s546 = scalar_lea.vmem [#allocation2], %s545
        %p547 = pneg %p106
        %p548 = pneg %p103
        %p549 = scmp.lt.s32.totalorder %s33, 1
        %s550 = scalar_select %p549, %s33, 1
        %s551 = scalar_lea.vmem %s3, %s550
        %p552 = pneg %p132
        %p553 = pneg %p129
        %p554 = pneg %p153
        %p555 = pneg %p150
        %p556 = pneg %p174
        %p557 = pneg %p171
        %p558 = pneg %p195
        %p559 = pneg %p192
        %p560 = pneg %p216
        %p561 = pneg %p213
        %p562 = pneg %p237
        %p563 = pneg %p234
        %p564 = pneg %p258
        %p565 = pneg %p255
        %p566 = pneg %p279
        %p567 = pneg %p276
        %p568 = pneg %p300
        %p569 = pneg %p297
        %p570 = pneg %p321
        %p571 = pneg %p318
        %p572 = pneg %p342
        %p573 = pneg %p339
        %p574 = pneg %p368
        %p575 = pneg %p365
        %s576 = sand.u32 %s355, 1
        %s577 = scalar_lea.sflag [#allocation4], %s576
        %s578 = sand.u32 %s355, 1
        %s579 = scalar_lea.vmem [#allocation11], %s578
        %p580 = scmp.lt.s32.totalorder %s33, 1
        %s581 = scalar_select %p580, %s33, 1
        %s582 = smul.addr %s581, 8
        %s583 = smul.addr %s582, 4
        %s584 = scalar_lea.vmem %s0, %s583
        %p585 = scmp.lt.s32.totalorder %s33, 1
        %s586 = scalar_select %p585, %s33, 1
        %s587 = smul.addr %s586, 8
        %s588 = smul.addr %s587, 4
        %s589 = scalar_lea.vmem %s1, %s588
        %p590 = scmp.lt.s32.totalorder %s33, 1
        %s591 = scalar_select %p590, %s33, 1
        %s592 = scalar_lea.vmem %s3, %s591
        %v594 = vld [vmem:[%s589] sm:$0xf]
        %v595 = vld [vmem:[%s589 + $0x4] sm:$0xf]
        %v596 = vld [vmem:[%s589 + $0x8] sm:$0xf]
        %v597 = vld [vmem:[%s589 + $0xc] sm:$0xf]
        %v598 = vld [vmem:[%s589 + $0x10] sm:$0xf]
        %v599 = vld [vmem:[%s589 + $0x14] sm:$0xf]
        %v600 = vld [vmem:[%s589 + $0x18] sm:$0xf]
        %v601 = vld [vmem:[%s589 + $0x1c] sm:$0xf]
        %v602 = vld [vmem:[%s584] sm:$0xf]
        %v603 = vld [vmem:[%s584 + $0x4] sm:$0xf]
        %v604 = vld [vmem:[%s584 + $0x8] sm:$0xf]
        %v605 = vld [vmem:[%s584 + $0xc] sm:$0xf]
        %v606 = vld [vmem:[%s584 + $0x10] sm:$0xf]
        %v607 = vld [vmem:[%s584 + $0x14] sm:$0xf]
        %v608 = vld [vmem:[%s584 + $0x18] sm:$0xf]
        %v609 = vld [vmem:[%s584 + $0x1c] sm:$0xf]
        %v618 = vunpack.c.l.b16 %v594
        %v619 = vunpack.c.l.b16 %v595
        %v620 = vunpack.c.l.b16 %v596
        %v621 = vunpack.c.l.b16 %v597
        %v622 = vunpack.c.l.b16 %v598
        %v623 = vunpack.c.l.b16 %v599
        %v624 = vunpack.c.l.b16 %v600
        %v625 = vunpack.c.l.b16 %v601
        %v626 = vpack.c.b16 %v619, %v618
        %v627 = vpack.c.b16 %v621, %v620
        %v628 = vpack.c.b16 %v623, %v622
        %v629 = vpack.c.b16 %v625, %v624
        %v638 = vunpack.c.l.b16 %v602
        %v639 = vunpack.c.l.b16 %v603
        %v640 = vunpack.c.l.b16 %v604
        %v641 = vunpack.c.l.b16 %v605
        %v642 = vunpack.c.l.b16 %v606
        %v643 = vunpack.c.l.b16 %v607
        %v644 = vunpack.c.l.b16 %v608
        %v645 = vunpack.c.l.b16 %v609
        %v646 = vpack.c.b16 %v639, %v638
        %v647 = vpack.c.b16 %v641, %v640
        %v648 = vpack.c.b16 %v643, %v642
        %v649 = vpack.c.b16 %v645, %v644
        %vm654 = vcmask 523264
        %v656 = vsel %vm654, %v626, 0
        %v659 = vsel %vm654, %v627, 0
        %v662 = vsel %vm654, %v628, 0
        %v665 = vsel %vm654, %v629, 0
        %667 = vmatprep.subr.bf16.mxu0 0
        %668 = vmatpush1.bf16.msra.mxu0 %v646
        %669 = vmatprep.subr.bf16.mxu0 0
        %670 = vmatpush1.bf16.msra.mxu0 %v647
        %671 = vmatprep.subr.bf16.mxu0 0
        %672 = vmatpush1.bf16.msra.mxu0 %v648
        %673 = vmatprep.subr.bf16.mxu0 0
        %674 = vmatpush1.bf16.msra.mxu0 %v649
        %675 = vmatprep.subr.bf16.mxu0 0
        %676 = vmatpush1.bf16.msra.mxu0 0
        %677 = vmatprep.subr.bf16.mxu0 0
        %678 = vmatpush1.bf16.msra.mxu0 0
        %679 = vmatprep.subr.bf16.mxu0 0
        %680 = vmatpush1.bf16.msra.mxu0 0
        %681 = vmatprep.subr.bf16.mxu0 0
        %682 = vmatpush1.bf16.msra.mxu0 0
        %683 = vmatprep.subr.bf16.mxu0 0
        %684 = vmatpush1.bf16.msra.mxu0 0
        %685 = vmatprep.subr.bf16.mxu0 0
        %686 = vmatpush1.bf16.msra.mxu0 0
        %687 = vmatprep.subr.bf16.mxu0 0
        %688 = vmatpush1.bf16.msra.mxu0 0
        %689 = vmatprep.subr.bf16.mxu0 0
        %690 = vmatpush1.bf16.msra.mxu0 0
        %691 = vmatprep.subr.bf16.mxu0 0
        %692 = vmatpush1.bf16.msra.mxu0 0
        %693 = vmatprep.subr.bf16.mxu0 0
        %694 = vmatpush1.bf16.msra.mxu0 0
        %695 = vmatprep.subr.bf16.mxu0 0
        %696 = vmatpush1.bf16.msra.mxu0 0
        %697 = vmatprep.subr.bf16.mxu0 0
        %698 = vmatpush1.bf16.msra.mxu0 0
        %699 = vmatprep.mubr.bf16.mxu0 0
        %700 = vmatmul.mubr.bf16.gmra.mrb[0].mxu0 %v656
        %v701 = vpop.f32.mrb[0].mxu0
        %v702 = vadd.f32 0.0, %v701
        %v703 = vpop.f32.mrb[0].mxu0
        %v704 = vpop.f32.mrb[0].mxu0
        %v705 = vadd.f32 0.0, %v704
        %v706 = vpop.f32.mrb[0].mxu0
        %707 = vmatprep.mubr.bf16.mxu0 0
        %708 = vmatmul.mubr.bf16.gmra.mrb[0].mxu0 %v659
        %v709 = vpop.f32.mrb[0].mxu0
        %v710 = vadd.f32 0.0, %v709
        %v711 = vpop.f32.mrb[0].mxu0
        %v712 = vpop.f32.mrb[0].mxu0
        %v713 = vadd.f32 0.0, %v712
        %v714 = vpop.f32.mrb[0].mxu0
        %715 = vmatprep.mubr.bf16.mxu0 0
        %716 = vmatmul.mubr.bf16.gmra.mrb[0].mxu0 %v662
        %v717 = vpop.f32.mrb[0].mxu0
        %v718 = vadd.f32 0.0, %v717
        %v719 = vpop.f32.mrb[0].mxu0
        %v720 = vpop.f32.mrb[0].mxu0
        %v721 = vadd.f32 0.0, %v720
        %v722 = vpop.f32.mrb[0].mxu0
        %723 = vmatprep.mubr.bf16.mxu0 0
        %724 = vmatmul.mubr.bf16.gmra.mrb[0].mxu0 %v665
        %v725 = vpop.f32.mrb[0].mxu0
        %v726 = vadd.f32 0.0, %v725
        %v727 = vpop.f32.mrb[0].mxu0
        %v728 = vpop.f32.mrb[0].mxu0
        %v729 = vadd.f32 0.0, %v728
        %v730 = vpop.f32.mrb[0].mxu0
        %731 = vdwg.mxu0
        %v732 = vld [vmem:[#allocation5] sm:$0xf]
        %v733 = vpack.c.bf16 %v705, %v702
        %v734 = vpack.c.bf16 %v713, %v710
        %v735 = vpack.c.bf16 %v721, %v718
        %v736 = vpack.c.bf16 %v729, %v726
        %vm737 = vcmask 64512
        %v739 = vsel %vm737, %v733, 0
        %v742 = vsel %vm737, %v734, 0
        %v745 = vsel %vm737, %v735, 0
        %v748 = vsel %vm737, %v736, 0
        %vm750 = vcmask 1043456
        %v752 = vsel %vm750, %v732, 0
        %754 = vmatprep.subr.bf16.mxu0 0
        %755 = vmatpush1.bf16.msra.mxu0 %v752
        %756 = vmatprep.subr.bf16.mxu0 0
        %757 = vmatpush1.bf16.msra.mxu0 0
        %758 = vmatprep.subr.bf16.mxu0 0
        %759 = vmatpush1.bf16.msra.mxu0 0
        %760 = vmatprep.subr.bf16.mxu0 0
        %761 = vmatpush1.bf16.msra.mxu0 0
        %762 = vmatprep.subr.bf16.mxu0 0
        %763 = vmatpush1.bf16.msra.mxu0 0
        %764 = vmatprep.subr.bf16.mxu0 0
        %765 = vmatpush1.bf16.msra.mxu0 0
        %766 = vmatprep.subr.bf16.mxu0 0
        %767 = vmatpush1.bf16.msra.mxu0 0
        %768 = vmatprep.subr.bf16.mxu0 0
        %769 = vmatpush1.bf16.msra.mxu0 0
        %770 = vmatprep.subr.bf16.mxu0 0
        %771 = vmatpush1.bf16.msra.mxu0 0
        %772 = vmatprep.subr.bf16.mxu0 0
        %773 = vmatpush1.bf16.msra.mxu0 0
        %774 = vmatprep.subr.bf16.mxu0 0
        %775 = vmatpush1.bf16.msra.mxu0 0
        %776 = vmatprep.subr.bf16.mxu0 0
        %777 = vmatpush1.bf16.msra.mxu0 0
        %778 = vmatprep.subr.bf16.mxu0 0
        %779 = vmatpush1.bf16.msra.mxu0 0
        %780 = vmatprep.subr.bf16.mxu0 0
        %781 = vmatpush1.bf16.msra.mxu0 0
        %782 = vmatprep.subr.bf16.mxu0 0
        %783 = vmatpush1.bf16.msra.mxu0 0
        %784 = vmatprep.subr.bf16.mxu0 0
        %785 = vmatpush1.bf16.msra.mxu0 0
        %786 = vmatprep.mubr.bf16.mxu0 0
        %787 = vmatmul.mubr.bf16.gmra.mrb[0].mxu0 %v739
        %v788 = vpop.f32.mrb[0].mxu0
        %v789 = vadd.f32 0.0, %v788
        %v790 = vpop.f32.mrb[0].mxu0
        %v791 = vpop.f32.mrb[0].mxu0
        %v792 = vadd.f32 0.0, %v791
        %v793 = vpop.f32.mrb[0].mxu0
        %794 = vmatprep.mubr.bf16.mxu0 0
        %795 = vmatmul.mubr.bf16.gmra.mrb[0].mxu0 %v742
        %v796 = vpop.f32.mrb[0].mxu0
        %v797 = vadd.f32 0.0, %v796
        %v798 = vpop.f32.mrb[0].mxu0
        %v799 = vpop.f32.mrb[0].mxu0
        %v800 = vadd.f32 0.0, %v799
        %v801 = vpop.f32.mrb[0].mxu0
        %802 = vmatprep.mubr.bf16.mxu0 0
        %803 = vmatmul.mubr.bf16.gmra.mrb[0].mxu0 %v745
        %v804 = vpop.f32.mrb[0].mxu0
        %v805 = vadd.f32 0.0, %v804
        %v806 = vpop.f32.mrb[0].mxu0
        %v807 = vpop.f32.mrb[0].mxu0
        %v808 = vadd.f32 0.0, %v807
        %v809 = vpop.f32.mrb[0].mxu0
        %810 = vmatprep.mubr.bf16.mxu0 0
        %811 = vmatmul.mubr.bf16.gmra.mrb[0].mxu0 %v748
        %v812 = vpop.f32.mrb[0].mxu0
        %v813 = vadd.f32 0.0, %v812
        %v814 = vpop.f32.mrb[0].mxu0
        %v815 = vpop.f32.mrb[0].mxu0
        %v816 = vadd.f32 0.0, %v815
        %v817 = vpop.f32.mrb[0].mxu0
        %818 = vdwg.mxu0
        %v819 = vld [vmem:[#allocation7] sm:$0x1]
        %v821 = vlaneseq
        %v822 = vshrl.u32 %v821, 7
        %v823 = vsub.s32 0, %v822
        %v824 = vrot.slane %v819, %v823
        %v826 = vadd.f32 %v789, %v824
        %v827 = vadd.f32 %v792, %v824
        %v828 = vadd.f32 %v797, %v824
        %v829 = vadd.f32 %v800, %v824
        %v830 = vadd.f32 %v805, %v824
        %v831 = vadd.f32 %v808, %v824
        %v832 = vadd.f32 %v813, %v824
        %v833 = vadd.f32 %v816, %v824
        %v834 = vmax.f32 %v826, 0.0
        %v835 = vmax.f32 %v827, 0.0
        %v836 = vmax.f32 %v828, 0.0
        %v837 = vmax.f32 %v829, 0.0
        %v838 = vmax.f32 %v830, 0.0
        %v839 = vmax.f32 %v831, 0.0
        %v840 = vmax.f32 %v832, 0.0
        %v841 = vmax.f32 %v833, 0.0
        %v842 = vpack.c.bf16 %v835, %v834
        %v843 = vpack.c.bf16 %v837, %v836
        %v844 = vpack.c.bf16 %v839, %v838
        %v845 = vpack.c.bf16 %v841, %v840
        %846 = vmatprep.subr.bf16.mxu0 0
        %847 = vmatpush1.bf16.msra.mxu0 %v842
        %848 = vmatprep.subr.bf16.mxu0 0
        %849 = vmatpush1.bf16.msra.mxu0 %v843
        %850 = vmatprep.subr.bf16.mxu0 0
        %851 = vmatpush1.bf16.msra.mxu0 %v844
        %852 = vmatprep.subr.bf16.mxu0 0
        %853 = vmatpush1.bf16.msra.mxu0 %v845
        %854 = vmatprep.subr.bf16.mxu0 0
        %855 = vmatpush1.bf16.msra.mxu0 0
        %856 = vmatprep.subr.bf16.mxu0 0
        %857 = vmatpush1.bf16.msra.mxu0 0
        %858 = vmatprep.subr.bf16.mxu0 0
        %859 = vmatpush1.bf16.msra.mxu0 0
        %860 = vmatprep.subr.bf16.mxu0 0
        %861 = vmatpush1.bf16.msra.mxu0 0
        %862 = vmatprep.subr.bf16.mxu0 0
        %863 = vmatpush1.bf16.msra.mxu0 0
        %864 = vmatprep.subr.bf16.mxu0 0
        %865 = vmatpush1.bf16.msra.mxu0 0
        %866 = vmatprep.subr.bf16.mxu0 0
        %867 = vmatpush1.bf16.msra.mxu0 0
        %868 = vmatprep.subr.bf16.mxu0 0
        %869 = vmatpush1.bf16.msra.mxu0 0
        %870 = vmatprep.subr.bf16.mxu0 0
        %871 = vmatpush1.bf16.msra.mxu0 0
        %872 = vmatprep.subr.bf16.mxu0 0
        %873 = vmatpush1.bf16.msra.mxu0 0
        %874 = vmatprep.subr.bf16.mxu0 0
        %875 = vmatpush1.bf16.msra.mxu0 0
        %876 = vmatprep.subr.bf16.mxu0 0
        %877 = vmatpush1.bf16.msra.mxu0 0
        %878 = vmatprep.mubr.bf16.mxu0 0
        %879 = vmatmul.mubr.bf16.gmra.mrb[0].mxu0 %v656
        %v880 = vpop.f32.mrb[0].mxu0
        %v881 = vadd.f32 0.0, %v880
        %v882 = vpop.f32.mrb[0].mxu0
        %v883 = vpop.f32.mrb[0].mxu0
        %v884 = vadd.f32 0.0, %v883
        %v885 = vpop.f32.mrb[0].mxu0
        %886 = vmatprep.mubr.bf16.mxu0 0
        %887 = vmatmul.mubr.bf16.gmra.mrb[0].mxu0 %v659
        %v888 = vpop.f32.mrb[0].mxu0
        %v889 = vadd.f32 0.0, %v888
        %v890 = vpop.f32.mrb[0].mxu0
        %v891 = vpop.f32.mrb[0].mxu0
        %v892 = vadd.f32 0.0, %v891
        %v893 = vpop.f32.mrb[0].mxu0
        %894 = vmatprep.mubr.bf16.mxu0 0
        %895 = vmatmul.mubr.bf16.gmra.mrb[0].mxu0 %v662
        %v896 = vpop.f32.mrb[0].mxu0
        %v897 = vadd.f32 0.0, %v896
        %v898 = vpop.f32.mrb[0].mxu0
        %v899 = vpop.f32.mrb[0].mxu0
        %v900 = vadd.f32 0.0, %v899
        %v901 = vpop.f32.mrb[0].mxu0
        %902 = vmatprep.mubr.bf16.mxu0 0
        %903 = vmatmul.mubr.bf16.gmra.mrb[0].mxu0 %v665
        %v904 = vpop.f32.mrb[0].mxu0
        %v905 = vadd.f32 0.0, %v904
        %v906 = vpop.f32.mrb[0].mxu0
        %v907 = vpop.f32.mrb[0].mxu0
        %v908 = vadd.f32 0.0, %v907
        %v909 = vpop.f32.mrb[0].mxu0
        %910 = vdwg.mxu0
        %v911 = vld [vmem:[%s6] sm:$0xf]
        %v912 = vld [vmem:[%s6 + $0x4] sm:$0xf]
        %v913 = vpack.c.bf16 %v884, %v881
        %v914 = vpack.c.bf16 %v892, %v889
        %v915 = vpack.c.bf16 %v900, %v897
        %v916 = vpack.c.bf16 %v908, %v905
        %v919 = vunpack.c.l.b16 %v911
        %v920 = vunpack.c.l.b16 %v912
        %v921 = vpack.c.b16 %v920, %v919
        %vm923 = vcmask 130048
        %v925 = vsel %vm923, %v913, 0
        %v928 = vsel %vm923, %v914, 0
        %v931 = vsel %vm923, %v915, 0
        %v934 = vsel %vm923, %v916, 0
        %936 = vmatprep.subr.bf16.mxu0 0
        %937 = vmatpush1.bf16.msra.mxu0 %v921
        %938 = vmatprep.subr.bf16.mxu0 0
        %939 = vmatpush1.bf16.msra.mxu0 0
        %940 = vmatprep.subr.bf16.mxu0 0
        %941 = vmatpush1.bf16.msra.mxu0 0
        %942 = vmatprep.subr.bf16.mxu0 0
        %943 = vmatpush1.bf16.msra.mxu0 0
        %944 = vmatprep.subr.bf16.mxu0 0
        %945 = vmatpush1.bf16.msra.mxu0 0
        %946 = vmatprep.subr.bf16.mxu0 0
        %947 = vmatpush1.bf16.msra.mxu0 0
        %948 = vmatprep.subr.bf16.mxu0 0
        %949 = vmatpush1.bf16.msra.mxu0 0
        %950 = vmatprep.subr.bf16.mxu0 0
        %951 = vmatpush1.bf16.msra.mxu0 0
        %952 = vmatprep.subr.bf16.mxu0 0
        %953 = vmatpush1.bf16.msra.mxu0 0
        %954 = vmatprep.subr.bf16.mxu0 0
        %955 = vmatpush1.bf16.msra.mxu0 0
        %956 = vmatprep.subr.bf16.mxu0 0
        %957 = vmatpush1.bf16.msra.mxu0 0
        %958 = vmatprep.subr.bf16.mxu0 0
        %959 = vmatpush1.bf16.msra.mxu0 0
        %960 = vmatprep.subr.bf16.mxu0 0
        %961 = vmatpush1.bf16.msra.mxu0 0
        %962 = vmatprep.subr.bf16.mxu0 0
        %963 = vmatpush1.bf16.msra.mxu0 0
        %964 = vmatprep.subr.bf16.mxu0 0
        %965 = vmatpush1.bf16.msra.mxu0 0
        %966 = vmatprep.subr.bf16.mxu0 0
        %967 = vmatpush1.bf16.msra.mxu0 0
        %968 = vmatprep.mubr.bf16.mxu0 0
        %969 = vmatmul.mubr.bf16.gmra.mrb[0].mxu0 %v925
        %v970 = vpop.f32.mrb[0].mxu0
        %v971 = vadd.f32 0.0, %v970
        %v972 = vpop.f32.mrb[0].mxu0
        %v973 = vpop.f32.mrb[0].mxu0
        %v974 = vadd.f32 0.0, %v973
        %v975 = vpop.f32.mrb[0].mxu0
        %976 = vmatprep.mubr.bf16.mxu0 0
        %977 = vmatmul.mubr.bf16.gmra.mrb[0].mxu0 %v928
        %v978 = vpop.f32.mrb[0].mxu0
        %v979 = vadd.f32 0.0, %v978
        %v980 = vpop.f32.mrb[0].mxu0
        %v981 = vpop.f32.mrb[0].mxu0
        %v982 = vadd.f32 0.0, %v981
        %v983 = vpop.f32.mrb[0].mxu0
        %984 = vmatprep.mubr.bf16.mxu0 0
        %985 = vmatmul.mubr.bf16.gmra.mrb[0].mxu0 %v931
        %v986 = vpop.f32.mrb[0].mxu0
        %v987 = vadd.f32 0.0, %v986
        %v988 = vpop.f32.mrb[0].mxu0
        %v989 = vpop.f32.mrb[0].mxu0
        %v990 = vadd.f32 0.0, %v989
        %v991 = vpop.f32.mrb[0].mxu0
        %992 = vmatprep.mubr.bf16.mxu0 0
        %993 = vmatmul.mubr.bf16.gmra.mrb[0].mxu0 %v934
        %v994 = vpop.f32.mrb[0].mxu0
        %v995 = vadd.f32 0.0, %v994
        %v996 = vpop.f32.mrb[0].mxu0
        %v997 = vpop.f32.mrb[0].mxu0
        %v998 = vadd.f32 0.0, %v997
        %v999 = vpop.f32.mrb[0].mxu0
        %1000 = vdwg.mxu0
        %v1001 = vld [vmem:[%s7] sm:$0x1]
        %v1003 = vlaneseq
        %v1004 = vshrl.u32 %v1003, 7
        %v1005 = vsub.s32 0, %v1004
        %v1006 = vrot.slane %v1001, %v1005
        %v1008 = vadd.f32 %v971, %v1006
        %v1009 = vadd.f32 %v974, %v1006
        %v1010 = vadd.f32 %v979, %v1006
        %v1011 = vadd.f32 %v982, %v1006
        %v1012 = vadd.f32 %v987, %v1006
        %v1013 = vadd.f32 %v990, %v1006
        %v1014 = vadd.f32 %v995, %v1006
        %v1015 = vadd.f32 %v998, %v1006
        %v1016 = vmax.f32 %v1008, 0.0
        %v1017 = vmax.f32 %v1009, 0.0
        %v1018 = vmax.f32 %v1010, 0.0
        %v1019 = vmax.f32 %v1011, 0.0
        %v1020 = vmax.f32 %v1012, 0.0
        %v1021 = vmax.f32 %v1013, 0.0
        %v1022 = vmax.f32 %v1014, 0.0
        %v1023 = vmax.f32 %v1015, 0.0
        %v1024 = vld [vmem:[%s8] sm:$0xf]
        %v1025 = vld [vmem:[%s8 + $0x4] sm:$0xf]
        %v1026 = vld [vmem:[%s8 + $0x8] sm:$0xf]
        %v1027 = vld [vmem:[%s8 + $0xc] sm:$0xf]
        %v1028 = vpack.c.bf16 %v1017, %v1016
        %v1029 = vpack.c.bf16 %v1019, %v1018
        %v1030 = vpack.c.bf16 %v1021, %v1020
        %v1031 = vpack.c.bf16 %v1023, %v1022
        %v1036 = vunpack.c.l.b16 %v1024
        %v1037 = vunpack.c.l.b16 %v1025
        %v1038 = vunpack.c.l.b16 %v1026
        %v1039 = vunpack.c.l.b16 %v1027
        %v1040 = vpack.c.b16 %v1037, %v1036
        %v1041 = vpack.c.b16 %v1039, %v1038
        %vm1044 = vcmask 261120
        %v1046 = vsel %vm1044, %v1028, 0
        %v1049 = vsel %vm1044, %v1029, 0
        %v1052 = vsel %vm1044, %v1030, 0
        %v1055 = vsel %vm1044, %v1031, 0
        %1057 = vmatprep.subr.bf16.mxu0 0
        %1058 = vmatpush1.bf16.msra.mxu0 %v1040
        %1059 = vmatprep.subr.bf16.mxu0 0
        %1060 = vmatpush1.bf16.msra.mxu0 %v1041
        %1061 = vmatprep.subr.bf16.mxu0 0
        %1062 = vmatpush1.bf16.msra.mxu0 0
        %1063 = vmatprep.subr.bf16.mxu0 0
        %1064 = vmatpush1.bf16.msra.mxu0 0
        %1065 = vmatprep.subr.bf16.mxu0 0
        %1066 = vmatpush1.bf16.msra.mxu0 0
        %1067 = vmatprep.subr.bf16.mxu0 0
        %1068 = vmatpush1.bf16.msra.mxu0 0
        %1069 = vmatprep.subr.bf16.mxu0 0
        %1070 = vmatpush1.bf16.msra.mxu0 0
        %1071 = vmatprep.subr.bf16.mxu0 0
        %1072 = vmatpush1.bf16.msra.mxu0 0
        %1073 = vmatprep.subr.bf16.mxu0 0
        %1074 = vmatpush1.bf16.msra.mxu0 0
        %1075 = vmatprep.subr.bf16.mxu0 0
        %1076 = vmatpush1.bf16.msra.mxu0 0
        %1077 = vmatprep.subr.bf16.mxu0 0
        %1078 = vmatpush1.bf16.msra.mxu0 0
        %1079 = vmatprep.subr.bf16.mxu0 0
        %1080 = vmatpush1.bf16.msra.mxu0 0
        %1081 = vmatprep.subr.bf16.mxu0 0
        %1082 = vmatpush1.bf16.msra.mxu0 0
        %1083 = vmatprep.subr.bf16.mxu0 0
        %1084 = vmatpush1.bf16.msra.mxu0 0
        %1085 = vmatprep.subr.bf16.mxu0 0
        %1086 = vmatpush1.bf16.msra.mxu0 0
        %1087 = vmatprep.subr.bf16.mxu0 0
        %1088 = vmatpush1.bf16.msra.mxu0 0
        %1089 = vmatprep.mubr.bf16.mxu0 0
        %1090 = vmatmul.mubr.bf16.gmra.mrb[0].mxu0 %v1046
        %v1091 = vpop.f32.mrb[0].mxu0
        %v1092 = vadd.f32 0.0, %v1091
        %v1093 = vpop.f32.mrb[0].mxu0
        %v1094 = vpop.f32.mrb[0].mxu0
        %v1095 = vadd.f32 0.0, %v1094
        %v1096 = vpop.f32.mrb[0].mxu0
        %1097 = vmatprep.mubr.bf16.mxu0 0
        %1098 = vmatmul.mubr.bf16.gmra.mrb[0].mxu0 %v1049
        %v1099 = vpop.f32.mrb[0].mxu0
        %v1100 = vadd.f32 0.0, %v1099
        %v1101 = vpop.f32.mrb[0].mxu0
        %v1102 = vpop.f32.mrb[0].mxu0
        %v1103 = vadd.f32 0.0, %v1102
        %v1104 = vpop.f32.mrb[0].mxu0
        %1105 = vmatprep.mubr.bf16.mxu0 0
        %1106 = vmatmul.mubr.bf16.gmra.mrb[0].mxu0 %v1052
        %v1107 = vpop.f32.mrb[0].mxu0
        %v1108 = vadd.f32 0.0, %v1107
        %v1109 = vpop.f32.mrb[0].mxu0
        %v1110 = vpop.f32.mrb[0].mxu0
        %v1111 = vadd.f32 0.0, %v1110
        %v1112 = vpop.f32.mrb[0].mxu0
        %1113 = vmatprep.mubr.bf16.mxu0 0
        %1114 = vmatmul.mubr.bf16.gmra.mrb[0].mxu0 %v1055
        %v1115 = vpop.f32.mrb[0].mxu0
        %v1116 = vadd.f32 0.0, %v1115
        %v1117 = vpop.f32.mrb[0].mxu0
        %v1118 = vpop.f32.mrb[0].mxu0
        %v1119 = vadd.f32 0.0, %v1118
        %v1120 = vpop.f32.mrb[0].mxu0
        %1121 = vdwg.mxu0
        %v1122 = vpack.c.bf16 %v1095, %v1092
        %v1123 = vpack.c.bf16 %v1103, %v1100
        %v1124 = vpack.c.bf16 %v1111, %v1108
        %v1125 = vpack.c.bf16 %v1119, %v1116
        %v1126 = vld [vmem:[%s9] sm:$0x1]
        %v1128 = vlaneseq
        %v1129 = vshrl.u32 %v1128, 7
        %v1130 = vsub.s32 0, %v1129
        %v1131 = vrot.slane %v1126, %v1130
        %1133 = vmatprep.subr.bf16.mxu0 0
        %1134 = vmatpush1.bf16.msra.mxu0 %v1122
        %1135 = vmatprep.subr.bf16.mxu0 0
        %1136 = vmatpush1.bf16.msra.mxu0 %v1123
        %1137 = vmatprep.subr.bf16.mxu0 0
        %1138 = vmatpush1.bf16.msra.mxu0 %v1124
        %1139 = vmatprep.subr.bf16.mxu0 0
        %1140 = vmatpush1.bf16.msra.mxu0 %v1125
        %1141 = vmatprep.subr.bf16.mxu0 0
        %1142 = vmatpush1.bf16.msra.mxu0 0
        %1143 = vmatprep.subr.bf16.mxu0 0
        %1144 = vmatpush1.bf16.msra.mxu0 0
        %1145 = vmatprep.subr.bf16.mxu0 0
        %1146 = vmatpush1.bf16.msra.mxu0 0
        %1147 = vmatprep.subr.bf16.mxu0 0
        %1148 = vmatpush1.bf16.msra.mxu0 0
        %1149 = vmatprep.subr.bf16.mxu0 0
        %1150 = vmatpush1.bf16.msra.mxu0 0
        %1151 = vmatprep.subr.bf16.mxu0 0
        %1152 = vmatpush1.bf16.msra.mxu0 0
        %1153 = vmatprep.subr.bf16.mxu0 0
        %1154 = vmatpush1.bf16.msra.mxu0 0
        %1155 = vmatprep.subr.bf16.mxu0 0
        %1156 = vmatpush1.bf16.msra.mxu0 0
        %1157 = vmatprep.subr.bf16.mxu0 0
        %1158 = vmatpush1.bf16.msra.mxu0 0
        %1159 = vmatprep.subr.bf16.mxu0 0
        %1160 = vmatpush1.bf16.msra.mxu0 0
        %1161 = vmatprep.subr.bf16.mxu0 0
        %1162 = vmatpush1.bf16.msra.mxu0 0
        %1163 = vmatprep.subr.bf16.mxu0 0
        %1164 = vmatpush1.bf16.msra.mxu0 0
        %1165 = vmatprep.mubr.bf16.mxu0 0
        %1166 = vmatmul.mubr.bf16.gmra.mrb[0].mxu0 %v656
        %v1167 = vpop.f32.mrb[0].mxu0
        %v1168 = vadd.f32 %v1131, %v1167
        %v1169 = vpop.f32.mrb[0].mxu0
        %v1170 = vpop.f32.mrb[0].mxu0
        %v1171 = vadd.f32 %v1131, %v1170
        %v1172 = vpop.f32.mrb[0].mxu0
        %1173 = vmatprep.mubr.bf16.mxu0 0
        %1174 = vmatmul.mubr.bf16.gmra.mrb[0].mxu0 %v659
        %v1175 = vpop.f32.mrb[0].mxu0
        %v1176 = vadd.f32 %v1131, %v1175
        %v1177 = vpop.f32.mrb[0].mxu0
        %v1178 = vpop.f32.mrb[0].mxu0
        %v1179 = vadd.f32 %v1131, %v1178
        %v1180 = vpop.f32.mrb[0].mxu0
        %1181 = vmatprep.mubr.bf16.mxu0 0
        %1182 = vmatmul.mubr.bf16.gmra.mrb[0].mxu0 %v662
        %v1183 = vpop.f32.mrb[0].mxu0
        %v1184 = vadd.f32 %v1131, %v1183
        %v1185 = vpop.f32.mrb[0].mxu0
        %v1186 = vpop.f32.mrb[0].mxu0
        %v1187 = vadd.f32 %v1131, %v1186
        %v1188 = vpop.f32.mrb[0].mxu0
        %1189 = vmatprep.mubr.bf16.mxu0 0
        %1190 = vmatmul.mubr.bf16.gmra.mrb[0].mxu0 %v665
        %v1191 = vpop.f32.mrb[0].mxu0
        %v1192 = vadd.f32 %v1131, %v1191
        %v1193 = vpop.f32.mrb[0].mxu0
        %v1194 = vpop.f32.mrb[0].mxu0
        %v1195 = vadd.f32 %v1131, %v1194
        %v1196 = vpop.f32.mrb[0].mxu0
        %1197 = vdwg.mxu0
        %v1198 = vld [vmem:[%s507] sm:$0xff]
        %v1199 = vld [vmem:[%s507 + $0x8] sm:$0xff]
        %v1200 = vld [vmem:[%s507 + $0x10] sm:$0xff]
        %v1201 = vld [vmem:[%s507 + $0x18] sm:$0xff]
        %v1202 = vld [vmem:[%s507 + $0x20] sm:$0xff]
        %v1203 = vld [vmem:[%s507 + $0x28] sm:$0xff]
        %v1204 = vld [vmem:[%s507 + $0x30] sm:$0xff]
        %v1205 = vld [vmem:[%s507 + $0x38] sm:$0xff]
        %vm1206 = vcmp.gt.f32.partialorder %v1198, 0.5
        %vm1207 = vcmp.gt.f32.partialorder %v1199, 0.5
        %vm1208 = vcmp.gt.f32.partialorder %v1200, 0.5
        %vm1209 = vcmp.gt.f32.partialorder %v1201, 0.5
        %vm1210 = vcmp.gt.f32.partialorder %v1202, 0.5
        %vm1211 = vcmp.gt.f32.partialorder %v1203, 0.5
        %vm1212 = vcmp.gt.f32.partialorder %v1204, 0.5
        %vm1213 = vcmp.gt.f32.partialorder %v1205, 0.5
        %v1214 = vsel %vm1206, %v1168, -1e+30
        %v1215 = vsel %vm1207, %v1171, -1e+30
        %v1216 = vsel %vm1208, %v1176, -1e+30
        %v1217 = vsel %vm1209, %v1179, -1e+30
        %v1218 = vsel %vm1210, %v1184, -1e+30
        %v1219 = vsel %vm1211, %v1187, -1e+30
        %v1220 = vsel %vm1212, %v1192, -1e+30
        %v1221 = vsel %vm1213, %v1195, -1e+30
        %v1222 = vmax.f32 %v1214, %v1218
        %v1223 = vmax.f32 %v1215, %v1219
        %v1224 = vmax.f32 %v1216, %v1220
        %v1225 = vmax.f32 %v1217, %v1221
        %v1226 = vmax.f32 %v1222, %v1223
        %v1227 = vmax.f32 %v1224, %v1225
        %v1228 = vmax.f32 %v1226, %v1227
        %v1229 = vrot.slane %v1228, 4
        %v1230 = vmax.f32 %v1228, %v1229
        %v1231 = vrot.slane %v1230, 2
        %v1232 = vmax.f32 %v1230, %v1231
        %v1233 = vrot.slane %v1232, 1
        %v1234 = vmax.f32 %v1232, %v1233
        %vm1235 = vcmp.le.f32.partialorder %v1234, -5e+29
        %v1236 = vsel %vm1235, 0.0, %v1234
        %v1237 = vld [vmem:[%s592] sm:$0x1]
        %v1238 = vmul.f32 %v1236, %v1237
        %v1239 = vpack.c.bf16 %v1238, %v1238
        %v1240 = vld [vmem:[#allocation8] sm:$0xff]
        %v1241 = vld [vmem:[#allocation8 + $0x8] sm:$0xff]
        %v1242 = vld [vmem:[#allocation8 + $0x10] sm:$0xff]
        %v1243 = vld [vmem:[#allocation8 + $0x18] sm:$0xff]
        %v1244 = vld [vmem:[#allocation8 + $0x20] sm:$0xff]
        %v1245 = vld [vmem:[#allocation8 + $0x28] sm:$0xff]
        %v1246 = vld [vmem:[#allocation8 + $0x30] sm:$0xff]
        %v1247 = vld [vmem:[#allocation8 + $0x38] sm:$0xff]
        %v1248 = vld [vmem:[#allocation8 + $0x40] sm:$0xff]
        %v1249 = vld [vmem:[#allocation8 + $0x48] sm:$0xff]
        %v1250 = vld [vmem:[#allocation8 + $0x50] sm:$0xff]
        %v1251 = vld [vmem:[#allocation8 + $0x58] sm:$0xff]
        %v1252 = vld [vmem:[#allocation8 + $0x60] sm:$0xff]
        %v1253 = vld [vmem:[#allocation8 + $0x68] sm:$0xff]
        %v1254 = vld [vmem:[#allocation8 + $0x70] sm:$0xff]
        %v1255 = vld [vmem:[#allocation8 + $0x78] sm:$0xff]
        %v1256 = vld [vmem:[#allocation8 + $0x80] sm:$0xff]
        %v1257 = vld [vmem:[#allocation8 + $0x88] sm:$0xff]
        %v1258 = vld [vmem:[#allocation8 + $0x90] sm:$0xff]
        %v1259 = vld [vmem:[#allocation8 + $0x98] sm:$0xff]
        %v1260 = vld [vmem:[#allocation8 + $0xa0] sm:$0xff]
        %v1261 = vld [vmem:[#allocation8 + $0xa8] sm:$0xff]
        %v1262 = vld [vmem:[#allocation8 + $0xb0] sm:$0xff]
        %v1263 = vld [vmem:[#allocation8 + $0xb8] sm:$0xff]
        %v1264 = vld [vmem:[#allocation8 + $0xc0] sm:$0xff]
        %v1265 = vld [vmem:[#allocation8 + $0xc8] sm:$0xff]
        %v1266 = vld [vmem:[#allocation8 + $0xd0] sm:$0xff]
        %v1267 = vld [vmem:[#allocation8 + $0xd8] sm:$0xff]
        %v1268 = vld [vmem:[#allocation8 + $0xe0] sm:$0xff]
        %v1269 = vld [vmem:[#allocation8 + $0xe8] sm:$0xff]
        %v1270 = vld [vmem:[#allocation8 + $0xf0] sm:$0xff]
        %v1271 = vld [vmem:[#allocation8 + $0xf8] sm:$0xff]
        %v1272 = vld [vmem:[%s11] sm:$0xf]
        %v1305 = vunpack.c.l.b16 %v1240
        %v1306 = vunpack.c.h.b16 %v1240
        %v1307 = vunpack.c.l.b16 %v1241
        %v1308 = vunpack.c.h.b16 %v1241
        %v1309 = vunpack.c.l.b16 %v1242
        %v1310 = vunpack.c.h.b16 %v1242
        %v1311 = vunpack.c.l.b16 %v1243
        %v1312 = vunpack.c.h.b16 %v1243
        %v1313 = vunpack.c.l.b16 %v1244
        %v1314 = vunpack.c.h.b16 %v1244
        %v1315 = vunpack.c.l.b16 %v1245
        %v1316 = vunpack.c.h.b16 %v1245
        %v1317 = vunpack.c.l.b16 %v1246
        %v1318 = vunpack.c.h.b16 %v1246
        %v1319 = vunpack.c.l.b16 %v1247
        %v1320 = vunpack.c.h.b16 %v1247
        %v1321 = vunpack.c.l.b16 %v1248
        %v1322 = vunpack.c.h.b16 %v1248
        %v1323 = vunpack.c.l.b16 %v1249
        %v1324 = vunpack.c.h.b16 %v1249
        %v1325 = vunpack.c.l.b16 %v1250
        %v1326 = vunpack.c.h.b16 %v1250
        %v1327 = vunpack.c.l.b16 %v1251
        %v1328 = vunpack.c.h.b16 %v1251
        %v1329 = vunpack.c.l.b16 %v1252
        %v1330 = vunpack.c.h.b16 %v1252
        %v1331 = vunpack.c.l.b16 %v1253
        %v1332 = vunpack.c.h.b16 %v1253
        %v1333 = vunpack.c.l.b16 %v1254
        %v1334 = vunpack.c.h.b16 %v1254
        %v1335 = vunpack.c.l.b16 %v1255
        %v1336 = vunpack.c.h.b16 %v1255
        %v1337 = vunpack.c.l.b16 %v1256
        %v1338 = vunpack.c.h.b16 %v1256
        %v1339 = vunpack.c.l.b16 %v1257
        %v1340 = vunpack.c.h.b16 %v1257
        %v1341 = vunpack.c.l.b16 %v1258
        %v1342 = vunpack.c.h.b16 %v1258
        %v1343 = vunpack.c.l.b16 %v1259
        %v1344 = vunpack.c.h.b16 %v1259
        %v1345 = vunpack.c.l.b16 %v1260
        %v1346 = vunpack.c.h.b16 %v1260
        %v1347 = vunpack.c.l.b16 %v1261
        %v1348 = vunpack.c.h.b16 %v1261
        %v1349 = vunpack.c.l.b16 %v1262
        %v1350 = vunpack.c.h.b16 %v1262
        %v1351 = vunpack.c.l.b16 %v1263
        %v1352 = vunpack.c.h.b16 %v1263
        %v1353 = vunpack.c.l.b16 %v1264
        %v1354 = vunpack.c.h.b16 %v1264
        %v1355 = vunpack.c.l.b16 %v1265
        %v1356 = vunpack.c.h.b16 %v1265
        %v1357 = vunpack.c.l.b16 %v1266
        %v1358 = vunpack.c.h.b16 %v1266
        %v1359 = vunpack.c.l.b16 %v1267
        %v1360 = vunpack.c.h.b16 %v1267
        %v1361 = vunpack.c.l.b16 %v1268
        %v1362 = vunpack.c.h.b16 %v1268
        %v1363 = vunpack.c.l.b16 %v1269
        %v1364 = vunpack.c.h.b16 %v1269
        %v1365 = vunpack.c.l.b16 %v1270
        %v1366 = vunpack.c.h.b16 %v1270
        %v1367 = vunpack.c.l.b16 %v1271
        %v1368 = vunpack.c.h.b16 %v1271
        %v1369 = vpack.c.b16 %v1309, %v1305
        %v1370 = vpack.c.b16 %v1310, %v1306
        %v1371 = vpack.c.b16 %v1311, %v1307
        %v1372 = vpack.c.b16 %v1312, %v1308
        %v1373 = vpack.c.b16 %v1317, %v1313
        %v1374 = vpack.c.b16 %v1318, %v1314
        %v1375 = vpack.c.b16 %v1319, %v1315
        %v1376 = vpack.c.b16 %v1320, %v1316
        %v1377 = vpack.c.b16 %v1325, %v1321
        %v1378 = vpack.c.b16 %v1326, %v1322
        %v1379 = vpack.c.b16 %v1327, %v1323
        %v1380 = vpack.c.b16 %v1328, %v1324
        %v1381 = vpack.c.b16 %v1333, %v1329
        %v1382 = vpack.c.b16 %v1334, %v1330
        %v1383 = vpack.c.b16 %v1335, %v1331
        %v1384 = vpack.c.b16 %v1336, %v1332
        %v1385 = vpack.c.b16 %v1341, %v1337
        %v1386 = vpack.c.b16 %v1342, %v1338
        %v1387 = vpack.c.b16 %v1343, %v1339
        %v1388 = vpack.c.b16 %v1344, %v1340
        %v1389 = vpack.c.b16 %v1349, %v1345
        %v1390 = vpack.c.b16 %v1350, %v1346
        %v1391 = vpack.c.b16 %v1351, %v1347
        %v1392 = vpack.c.b16 %v1352, %v1348
        %v1393 = vpack.c.b16 %v1357, %v1353
        %v1394 = vpack.c.b16 %v1358, %v1354
        %v1395 = vpack.c.b16 %v1359, %v1355
        %v1396 = vpack.c.b16 %v1360, %v1356
        %v1397 = vpack.c.b16 %v1365, %v1361
        %v1398 = vpack.c.b16 %v1366, %v1362
        %v1399 = vpack.c.b16 %v1367, %v1363
        %v1400 = vpack.c.b16 %v1368, %v1364
        %v1434 = vlaneseq
        %v1435 = vshrl.u32 %v1434, 7
        %v1436 = vsub.s32 0, %v1435
        %v1437 = vrot.slane %v1272, %v1436
        %v1438 = vlaneseq
        %v1439 = vshrl.u32 %v1438, 7
        %v1440 = vsub.s32 1, %v1439
        %v1441 = vrot.slane %v1272, %v1440
        %v1442 = vlaneseq
        %v1443 = vshrl.u32 %v1442, 7
        %v1444 = vsub.s32 2, %v1443
        %v1445 = vrot.slane %v1272, %v1444
        %v1446 = vlaneseq
        %v1447 = vshrl.u32 %v1446, 7
        %v1448 = vsub.s32 3, %v1447
        %v1449 = vrot.slane %v1272, %v1448
        %1454 = vmatprep.subr.bf16.mxu0 %v1370
        %1455 = vmatpush1.bf16.msra.mxu0 %v1369
        %1456 = vmatprep.subr.bf16.mxu0 %v1374
        %1457 = vmatpush1.bf16.msra.mxu0 %v1373
        %1458 = vmatprep.subr.bf16.mxu0 %v1378
        %1459 = vmatpush1.bf16.msra.mxu0 %v1377
        %1460 = vmatprep.subr.bf16.mxu0 %v1382
        %1461 = vmatpush1.bf16.msra.mxu0 %v1381
        %1462 = vmatprep.subr.bf16.mxu0 %v1386
        %1463 = vmatpush1.bf16.msra.mxu0 %v1385
        %1464 = vmatprep.subr.bf16.mxu0 %v1390
        %1465 = vmatpush1.bf16.msra.mxu0 %v1389
        %1466 = vmatprep.subr.bf16.mxu0 %v1394
        %1467 = vmatpush1.bf16.msra.mxu0 %v1393
        %1468 = vmatprep.subr.bf16.mxu0 %v1398
        %1469 = vmatpush1.bf16.msra.mxu0 %v1397
        %1470 = vmatprep.subr.bf16.mxu0 0
        %1471 = vmatpush1.bf16.msra.mxu0 0
        %1472 = vmatprep.subr.bf16.mxu0 0
        %1473 = vmatpush1.bf16.msra.mxu0 0
        %1474 = vmatprep.subr.bf16.mxu0 0
        %1475 = vmatpush1.bf16.msra.mxu0 0
        %1476 = vmatprep.subr.bf16.mxu0 0
        %1477 = vmatpush1.bf16.msra.mxu0 0
        %1478 = vmatprep.subr.bf16.mxu0 0
        %1479 = vmatpush1.bf16.msra.mxu0 0
        %1480 = vmatprep.subr.bf16.mxu0 0
        %1481 = vmatpush1.bf16.msra.mxu0 0
        %1482 = vmatprep.subr.bf16.mxu0 0
        %1483 = vmatpush1.bf16.msra.mxu0 0
        %1484 = vmatprep.subr.bf16.mxu0 0
        %1485 = vmatpush1.bf16.msra.mxu0 0
        %1486 = vmatprep.mubr.bf16.mxu0 0
        %1487 = vmatmul.mubr.bf16.gmra.mrb[0].mxu0 %v1239
        %v1488 = vpop.f32.mrb[0].mxu0
        %v1489 = vadd.f32 %v1437, %v1488
        %v1490 = vpop.f32.mrb[0].mxu0
        %v1491 = vadd.f32 %v1441, %v1490
        %v1492 = vpop.f32.mrb[0].mxu0
        %v1493 = vpop.f32.mrb[0].mxu0
        %1494 = vdwg.mxu0
        %1495 = vmatprep.subr.bf16.mxu0 %v1372
        %1496 = vmatpush1.bf16.msra.mxu0 %v1371
        %1497 = vmatprep.subr.bf16.mxu0 %v1376
        %1498 = vmatpush1.bf16.msra.mxu0 %v1375
        %1499 = vmatprep.subr.bf16.mxu0 %v1380
        %1500 = vmatpush1.bf16.msra.mxu0 %v1379
        %1501 = vmatprep.subr.bf16.mxu0 %v1384
        %1502 = vmatpush1.bf16.msra.mxu0 %v1383
        %1503 = vmatprep.subr.bf16.mxu0 %v1388
        %1504 = vmatpush1.bf16.msra.mxu0 %v1387
        %1505 = vmatprep.subr.bf16.mxu0 %v1392
        %1506 = vmatpush1.bf16.msra.mxu0 %v1391
        %1507 = vmatprep.subr.bf16.mxu0 %v1396
        %1508 = vmatpush1.bf16.msra.mxu0 %v1395
        %1509 = vmatprep.subr.bf16.mxu0 %v1400
        %1510 = vmatpush1.bf16.msra.mxu0 %v1399
        %1511 = vmatprep.subr.bf16.mxu0 0
        %1512 = vmatpush1.bf16.msra.mxu0 0
        %1513 = vmatprep.subr.bf16.mxu0 0
        %1514 = vmatpush1.bf16.msra.mxu0 0
        %1515 = vmatprep.subr.bf16.mxu0 0
        %1516 = vmatpush1.bf16.msra.mxu0 0
        %1517 = vmatprep.subr.bf16.mxu0 0
        %1518 = vmatpush1.bf16.msra.mxu0 0
        %1519 = vmatprep.subr.bf16.mxu0 0
        %1520 = vmatpush1.bf16.msra.mxu0 0
        %1521 = vmatprep.subr.bf16.mxu0 0
        %1522 = vmatpush1.bf16.msra.mxu0 0
        %1523 = vmatprep.subr.bf16.mxu0 0
        %1524 = vmatpush1.bf16.msra.mxu0 0
        %1525 = vmatprep.subr.bf16.mxu0 0
        %1526 = vmatpush1.bf16.msra.mxu0 0
        %1527 = vmatprep.mubr.bf16.mxu0 0
        %1528 = vmatmul.mubr.bf16.gmra.mrb[0].mxu0 %v1239
        %v1529 = vpop.f32.mrb[0].mxu0
        %v1530 = vadd.f32 %v1445, %v1529
        %v1531 = vpop.f32.mrb[0].mxu0
        %v1532 = vadd.f32 %v1449, %v1531
        %v1533 = vpop.f32.mrb[0].mxu0
        %v1534 = vpop.f32.mrb[0].mxu0
        %1535 = vdwg.mxu0
        %v1536 = vmax.f32 %v1489, 0.0
        %v1537 = vmax.f32 %v1491, 0.0
        %v1538 = vmax.f32 %v1530, 0.0
        %v1539 = vmax.f32 %v1532, 0.0
        %v1540 = vpack.c.bf16 %v1536, %v1536
        %v1541 = vpack.c.bf16 %v1537, %v1537
        %v1542 = vpack.c.bf16 %v1538, %v1538
        %v1543 = vpack.c.bf16 %v1539, %v1539
        %v1544 = vld [vmem:[#allocation10] sm:$0xf]
        %v1545 = vld [vmem:[#allocation10 + $0x4] sm:$0xf]
        %v1546 = vld [vmem:[#allocation10 + $0x8] sm:$0xf]
        %v1547 = vld [vmem:[#allocation10 + $0xc] sm:$0xf]
        %v1548 = vld [vmem:[#allocation10 + $0x10] sm:$0xf]
        %v1549 = vld [vmem:[#allocation10 + $0x14] sm:$0xf]
        %v1550 = vld [vmem:[#allocation10 + $0x18] sm:$0xf]
        %v1551 = vld [vmem:[#allocation10 + $0x1c] sm:$0xf]
        %v1552 = vld [vmem:[#allocation10 + $0x20] sm:$0xf]
        %v1553 = vld [vmem:[#allocation10 + $0x24] sm:$0xf]
        %v1554 = vld [vmem:[#allocation10 + $0x28] sm:$0xf]
        %v1555 = vld [vmem:[#allocation10 + $0x2c] sm:$0xf]
        %v1556 = vld [vmem:[#allocation10 + $0x30] sm:$0xf]
        %v1557 = vld [vmem:[#allocation10 + $0x34] sm:$0xf]
        %v1558 = vld [vmem:[#allocation10 + $0x38] sm:$0xf]
        %v1559 = vld [vmem:[#allocation10 + $0x3c] sm:$0xf]
        %v1560 = vld [vmem:[#allocation10 + $0x40] sm:$0xf]
        %v1561 = vld [vmem:[#allocation10 + $0x44] sm:$0xf]
        %v1562 = vld [vmem:[#allocation10 + $0x48] sm:$0xf]
        %v1563 = vld [vmem:[#allocation10 + $0x4c] sm:$0xf]
        %v1564 = vld [vmem:[#allocation10 + $0x50] sm:$0xf]
        %v1565 = vld [vmem:[#allocation10 + $0x54] sm:$0xf]
        %v1566 = vld [vmem:[#allocation10 + $0x58] sm:$0xf]
        %v1567 = vld [vmem:[#allocation10 + $0x5c] sm:$0xf]
        %v1568 = vld [vmem:[#allocation10 + $0x60] sm:$0xf]
        %v1569 = vld [vmem:[#allocation10 + $0x64] sm:$0xf]
        %v1570 = vld [vmem:[#allocation10 + $0x68] sm:$0xf]
        %v1571 = vld [vmem:[#allocation10 + $0x6c] sm:$0xf]
        %v1572 = vld [vmem:[#allocation10 + $0x70] sm:$0xf]
        %v1573 = vld [vmem:[#allocation10 + $0x74] sm:$0xf]
        %v1574 = vld [vmem:[#allocation10 + $0x78] sm:$0xf]
        %v1575 = vld [vmem:[#allocation10 + $0x7c] sm:$0xf]
        %v1576 = vld [vmem:[#allocation10 + $0x80] sm:$0xf]
        %v1577 = vld [vmem:[#allocation10 + $0x84] sm:$0xf]
        %v1578 = vld [vmem:[#allocation10 + $0x88] sm:$0xf]
        %v1579 = vld [vmem:[#allocation10 + $0x8c] sm:$0xf]
        %v1580 = vld [vmem:[#allocation10 + $0x90] sm:$0xf]
        %v1581 = vld [vmem:[#allocation10 + $0x94] sm:$0xf]
        %v1582 = vld [vmem:[#allocation10 + $0x98] sm:$0xf]
        %v1583 = vld [vmem:[#allocation10 + $0x9c] sm:$0xf]
        %v1584 = vld [vmem:[#allocation10 + $0xa0] sm:$0xf]
        %v1585 = vld [vmem:[#allocation10 + $0xa4] sm:$0xf]
        %v1586 = vld [vmem:[#allocation10 + $0xa8] sm:$0xf]
        %v1587 = vld [vmem:[#allocation10 + $0xac] sm:$0xf]
        %v1588 = vld [vmem:[#allocation10 + $0xb0] sm:$0xf]
        %v1589 = vld [vmem:[#allocation10 + $0xb4] sm:$0xf]
        %v1590 = vld [vmem:[#allocation10 + $0xb8] sm:$0xf]
        %v1591 = vld [vmem:[#allocation10 + $0xbc] sm:$0xf]
        %v1592 = vld [vmem:[#allocation10 + $0xc0] sm:$0xf]
        %v1593 = vld [vmem:[#allocation10 + $0xc4] sm:$0xf]
        %v1594 = vld [vmem:[#allocation10 + $0xc8] sm:$0xf]
        %v1595 = vld [vmem:[#allocation10 + $0xcc] sm:$0xf]
        %v1596 = vld [vmem:[#allocation10 + $0xd0] sm:$0xf]
        %v1597 = vld [vmem:[#allocation10 + $0xd4] sm:$0xf]
        %v1598 = vld [vmem:[#allocation10 + $0xd8] sm:$0xf]
        %v1599 = vld [vmem:[#allocation10 + $0xdc] sm:$0xf]
        %v1600 = vld [vmem:[#allocation10 + $0xe0] sm:$0xf]
        %v1601 = vld [vmem:[#allocation10 + $0xe4] sm:$0xf]
        %v1602 = vld [vmem:[#allocation10 + $0xe8] sm:$0xf]
        %v1603 = vld [vmem:[#allocation10 + $0xec] sm:$0xf]
        %v1604 = vld [vmem:[#allocation10 + $0xf0] sm:$0xf]
        %v1605 = vld [vmem:[#allocation10 + $0xf4] sm:$0xf]
        %v1606 = vld [vmem:[#allocation10 + $0xf8] sm:$0xf]
        %v1607 = vld [vmem:[#allocation10 + $0xfc] sm:$0xf]
        %v1608 = vld [vmem:[%s13] sm:$0x1]
        %v1673 = vunpack.c.l.b16 %v1544
        %v1674 = vunpack.c.l.b16 %v1545
        %v1675 = vunpack.c.l.b16 %v1546
        %v1676 = vunpack.c.l.b16 %v1547
        %v1677 = vunpack.c.l.b16 %v1548
        %v1678 = vunpack.c.l.b16 %v1549
        %v1679 = vunpack.c.l.b16 %v1550
        %v1680 = vunpack.c.l.b16 %v1551
        %v1681 = vunpack.c.l.b16 %v1552
        %v1682 = vunpack.c.l.b16 %v1553
        %v1683 = vunpack.c.l.b16 %v1554
        %v1684 = vunpack.c.l.b16 %v1555
        %v1685 = vunpack.c.l.b16 %v1556
        %v1686 = vunpack.c.l.b16 %v1557
        %v1687 = vunpack.c.l.b16 %v1558
        %v1688 = vunpack.c.l.b16 %v1559
        %v1689 = vunpack.c.l.b16 %v1560
        %v1690 = vunpack.c.l.b16 %v1561
        %v1691 = vunpack.c.l.b16 %v1562
        %v1692 = vunpack.c.l.b16 %v1563
        %v1693 = vunpack.c.l.b16 %v1564
        %v1694 = vunpack.c.l.b16 %v1565
        %v1695 = vunpack.c.l.b16 %v1566
        %v1696 = vunpack.c.l.b16 %v1567
        %v1697 = vunpack.c.l.b16 %v1568
        %v1698 = vunpack.c.l.b16 %v1569
        %v1699 = vunpack.c.l.b16 %v1570
        %v1700 = vunpack.c.l.b16 %v1571
        %v1701 = vunpack.c.l.b16 %v1572
        %v1702 = vunpack.c.l.b16 %v1573
        %v1703 = vunpack.c.l.b16 %v1574
        %v1704 = vunpack.c.l.b16 %v1575
        %v1705 = vunpack.c.l.b16 %v1576
        %v1706 = vunpack.c.l.b16 %v1577
        %v1707 = vunpack.c.l.b16 %v1578
        %v1708 = vunpack.c.l.b16 %v1579
        %v1709 = vunpack.c.l.b16 %v1580
        %v1710 = vunpack.c.l.b16 %v1581
        %v1711 = vunpack.c.l.b16 %v1582
        %v1712 = vunpack.c.l.b16 %v1583
        %v1713 = vunpack.c.l.b16 %v1584
        %v1714 = vunpack.c.l.b16 %v1585
        %v1715 = vunpack.c.l.b16 %v1586
        %v1716 = vunpack.c.l.b16 %v1587
        %v1717 = vunpack.c.l.b16 %v1588
        %v1718 = vunpack.c.l.b16 %v1589
        %v1719 = vunpack.c.l.b16 %v1590
        %v1720 = vunpack.c.l.b16 %v1591
        %v1721 = vunpack.c.l.b16 %v1592
        %v1722 = vunpack.c.l.b16 %v1593
        %v1723 = vunpack.c.l.b16 %v1594
        %v1724 = vunpack.c.l.b16 %v1595
        %v1725 = vunpack.c.l.b16 %v1596
        %v1726 = vunpack.c.l.b16 %v1597
        %v1727 = vunpack.c.l.b16 %v1598
        %v1728 = vunpack.c.l.b16 %v1599
        %v1729 = vunpack.c.l.b16 %v1600
        %v1730 = vunpack.c.l.b16 %v1601
        %v1731 = vunpack.c.l.b16 %v1602
        %v1732 = vunpack.c.l.b16 %v1603
        %v1733 = vunpack.c.l.b16 %v1604
        %v1734 = vunpack.c.l.b16 %v1605
        %v1735 = vunpack.c.l.b16 %v1606
        %v1736 = vunpack.c.l.b16 %v1607
        %v1737 = vpack.c.b16 %v1674, %v1673
        %v1738 = vpack.c.b16 %v1676, %v1675
        %v1739 = vpack.c.b16 %v1678, %v1677
        %v1740 = vpack.c.b16 %v1680, %v1679
        %v1741 = vpack.c.b16 %v1682, %v1681
        %v1742 = vpack.c.b16 %v1684, %v1683
        %v1743 = vpack.c.b16 %v1686, %v1685
        %v1744 = vpack.c.b16 %v1688, %v1687
        %v1745 = vpack.c.b16 %v1690, %v1689
        %v1746 = vpack.c.b16 %v1692, %v1691
        %v1747 = vpack.c.b16 %v1694, %v1693
        %v1748 = vpack.c.b16 %v1696, %v1695
        %v1749 = vpack.c.b16 %v1698, %v1697
        %v1750 = vpack.c.b16 %v1700, %v1699
        %v1751 = vpack.c.b16 %v1702, %v1701
        %v1752 = vpack.c.b16 %v1704, %v1703
        %v1753 = vpack.c.b16 %v1706, %v1705
        %v1754 = vpack.c.b16 %v1708, %v1707
        %v1755 = vpack.c.b16 %v1710, %v1709
        %v1756 = vpack.c.b16 %v1712, %v1711
        %v1757 = vpack.c.b16 %v1714, %v1713
        %v1758 = vpack.c.b16 %v1716, %v1715
        %v1759 = vpack.c.b16 %v1718, %v1717
        %v1760 = vpack.c.b16 %v1720, %v1719
        %v1761 = vpack.c.b16 %v1722, %v1721
        %v1762 = vpack.c.b16 %v1724, %v1723
        %v1763 = vpack.c.b16 %v1726, %v1725
        %v1764 = vpack.c.b16 %v1728, %v1727
        %v1765 = vpack.c.b16 %v1730, %v1729
        %v1766 = vpack.c.b16 %v1732, %v1731
        %v1767 = vpack.c.b16 %v1734, %v1733
        %v1768 = vpack.c.b16 %v1736, %v1735
        %1801 = vmatprep.subr.bf16.mxu0 0
        %1802 = vmatpush1.bf16.msra.mxu0 %v1737
        %1803 = vmatprep.subr.bf16.mxu0 0
        %1804 = vmatpush1.bf16.msra.mxu0 %v1738
        %1805 = vmatprep.subr.bf16.mxu0 0
        %1806 = vmatpush1.bf16.msra.mxu0 %v1739
        %1807 = vmatprep.subr.bf16.mxu0 0
        %1808 = vmatpush1.bf16.msra.mxu0 %v1740
        %1809 = vmatprep.subr.bf16.mxu0 0
        %1810 = vmatpush1.bf16.msra.mxu0 %v1741
        %1811 = vmatprep.subr.bf16.mxu0 0
        %1812 = vmatpush1.bf16.msra.mxu0 %v1742
        %1813 = vmatprep.subr.bf16.mxu0 0
        %1814 = vmatpush1.bf16.msra.mxu0 %v1743
        %1815 = vmatprep.subr.bf16.mxu0 0
        %1816 = vmatpush1.bf16.msra.mxu0 %v1744
        %1817 = vmatprep.subr.bf16.mxu0 0
        %1818 = vmatpush1.bf16.msra.mxu0 %v1745
        %1819 = vmatprep.subr.bf16.mxu0 0
        %1820 = vmatpush1.bf16.msra.mxu0 %v1746
        %1821 = vmatprep.subr.bf16.mxu0 0
        %1822 = vmatpush1.bf16.msra.mxu0 %v1747
        %1823 = vmatprep.subr.bf16.mxu0 0
        %1824 = vmatpush1.bf16.msra.mxu0 %v1748
        %1825 = vmatprep.subr.bf16.mxu0 0
        %1826 = vmatpush1.bf16.msra.mxu0 %v1749
        %1827 = vmatprep.subr.bf16.mxu0 0
        %1828 = vmatpush1.bf16.msra.mxu0 %v1750
        %1829 = vmatprep.subr.bf16.mxu0 0
        %1830 = vmatpush1.bf16.msra.mxu0 %v1751
        %1831 = vmatprep.subr.bf16.mxu0 0
        %1832 = vmatpush1.bf16.msra.mxu0 %v1752
        %1833 = vmatprep.mubr.bf16.mxu0 %v1541
        %1834 = vmatmul.mubr.bf16.gmra.mrb[0].mxu0 %v1540
        %v1835 = vpop.f32.mrb[0].mxu0
        %v1836 = vadd.f32 %v1608, %v1835
        %v1837 = vpop.f32.mrb[0].mxu0
        %v1838 = vpop.f32.mrb[0].mxu0
        %v1839 = vpop.f32.mrb[0].mxu0
        %1840 = vdwg.mxu0
        %1841 = vmatprep.subr.bf16.mxu0 0
        %1842 = vmatpush1.bf16.msra.mxu0 %v1753
        %1843 = vmatprep.subr.bf16.mxu0 0
        %1844 = vmatpush1.bf16.msra.mxu0 %v1754
        %1845 = vmatprep.subr.bf16.mxu0 0
        %1846 = vmatpush1.bf16.msra.mxu0 %v1755
        %1847 = vmatprep.subr.bf16.mxu0 0
        %1848 = vmatpush1.bf16.msra.mxu0 %v1756
        %1849 = vmatprep.subr.bf16.mxu0 0
        %1850 = vmatpush1.bf16.msra.mxu0 %v1757
        %1851 = vmatprep.subr.bf16.mxu0 0
        %1852 = vmatpush1.bf16.msra.mxu0 %v1758
        %1853 = vmatprep.subr.bf16.mxu0 0
        %1854 = vmatpush1.bf16.msra.mxu0 %v1759
        %1855 = vmatprep.subr.bf16.mxu0 0
        %1856 = vmatpush1.bf16.msra.mxu0 %v1760
        %1857 = vmatprep.subr.bf16.mxu0 0
        %1858 = vmatpush1.bf16.msra.mxu0 %v1761
        %1859 = vmatprep.subr.bf16.mxu0 0
        %1860 = vmatpush1.bf16.msra.mxu0 %v1762
        %1861 = vmatprep.subr.bf16.mxu0 0
        %1862 = vmatpush1.bf16.msra.mxu0 %v1763
        %1863 = vmatprep.subr.bf16.mxu0 0
        %1864 = vmatpush1.bf16.msra.mxu0 %v1764
        %1865 = vmatprep.subr.bf16.mxu0 0
        %1866 = vmatpush1.bf16.msra.mxu0 %v1765
        %1867 = vmatprep.subr.bf16.mxu0 0
        %1868 = vmatpush1.bf16.msra.mxu0 %v1766
        %1869 = vmatprep.subr.bf16.mxu0 0
        %1870 = vmatpush1.bf16.msra.mxu0 %v1767
        %1871 = vmatprep.subr.bf16.mxu0 0
        %1872 = vmatpush1.bf16.msra.mxu0 %v1768
        %1873 = vmatprep.mubr.bf16.mxu0 %v1543
        %1874 = vmatmul.mubr.bf16.gmra.mrb[0].mxu0 %v1542
        %v1875 = vpop.f32.mrb[0].mxu0
        %v1876 = vadd.f32 %v1836, %v1875
        %v1877 = vpop.f32.mrb[0].mxu0
        %v1878 = vpop.f32.mrb[0].mxu0
        %v1879 = vpop.f32.mrb[0].mxu0
        %1880 = vdwg.mxu0
        %1881 = vst [vmem:[%s579] sm:$0x1] %v1876
        %s1882 = sand.u32 %s355, 1
        %s1883 = scalar_lea.sflag [#allocation4], %s1882
        %s1884 = sand.u32 %s355, 1
        %s1885 = scalar_lea.vmem [#allocation11], %s1884
        // Predicated region
        $region97: #{tpu_custom_call.1} parent=75 // pred_check
          %p1886 = pneg %p365
        $region98: #{tpu_custom_call.1} parent=75 // pred_check_branch
          %1888 = sbr.rel (%p1886) target = $region100
        $region99: #{tpu_custom_call.1} parent=75 // pred_region
          %s1890 = ssub.s32 16, 16
          %1891 = vsyncadd %s1883, %s1890
          %s1892 = smul.addr %s33, 16
          %s1893 = scalar_lea.hbm %s14, %s1892
          %s1895 = sshll.u32 %s1885, 4
          %s1896 = int_to_ptr.vmem [resolvable:$true] %s1895
          %1898 = dma.vmem_to_hbm [thread:$0]  %s1896, 16, %s1893, %s1883
        $region100: #{tpu_custom_call.1} parent=75 // pred_fallthru
          _
      $region76: #{tpu_custom_call.1} parent=5 // pred_fallthru
        _
      %p1899 = scmp.le.s32.totalorder 2, %s28
      // Predicated region
      $region101: #{tpu_custom_call.1} parent=5 // pred_check
        %p1900 = pneg %p1899
      $region102: #{tpu_custom_call.1} parent=5 // pred_check_branch
        %1902 = sbr.rel (%p1900) target = $region104
      $region103: #{tpu_custom_call.1} parent=5 // pred_region
        %s1903 = ssub.s32 %s28, 2
        // Predicated region
        $region105: #{tpu_custom_call.1} parent=103 // pred_check
          %p1904 = pneg %p371
        $region106: #{tpu_custom_call.1} parent=103 // pred_check_branch
          %1906 = sbr.rel (%p1904) target = $region108
        $region107: #{tpu_custom_call.1} parent=103 // pred_region
          %s1907 = sand.u32 %s356, 1
          %s1908 = scalar_lea.sflag [#allocation4], %s1907
          %s1909 = sand.u32 %s356, 1
          %s1910 = scalar_lea.vmem [#allocation11], %s1909
          %1911 = dma.done %s1908, 16
        $region108: #{tpu_custom_call.1} parent=103 // pred_fallthru
          _
      $region104: #{tpu_custom_call.1} parent=5 // pred_fallthru
        _
    $region6: #{tpu_custom_call.1} parent=1 // loop_footer
      %s32 = sadd.s32 1, %s28
    $region7: #{tpu_custom_call.1} parent=1 // loop_footer_branch
      %27 = sbr.rel target = $region3
    $region8: #{tpu_custom_call.1} parent=1 // loop_exit
      _
    %1912 = vsyncpa [#allocation3], 1
    %s1913 = scalar_lea.sflag [#allocation3], 1
    %1914 = vsyncpa %s1913, 1
    %1915 = vsyncpa [#allocation6], 1
    %1916 = vsyncpa [#allocation9], 1
    %1917 = vsyncpa [#allocation4], 1
    %s1918 = scalar_lea.sflag [#allocation4], 1
    %1919 = vsyncpa %s1918, 1

</llo_original>
